<compile_context>
chip_gen: v7x
topology: tpu7x:2x2x1
jax: 0.10.0
libtpu: 0.0.40
codegen_flags: <defaults>
</compile_context>

<pallas_src>
import functools

import numpy as np
import jax
import jax.numpy as jnp
from jax.experimental import pallas as pl
from jax.experimental.pallas import tpu as pltpu


def _round_up(x, m):
    return (x + m - 1) // m * m


# ----------------------------------------------------------------------------
# Weight packing (done ONCE, outside the jitted forward).
#
# Packed gate-column order is gate-major, direction-minor:
#   [ i_f i_b | f_f f_b | o_f o_b | g_f g_b ]   (each block H lanes wide)
# so that i/f/o/g "cat" slices line up lane-for-lane with the interleaved
# state [h_f | h_b] / [c_f | c_b].
# ----------------------------------------------------------------------------
def pack_params(params, n_layers, bidirectional):
    num_dir = 2 if bidirectional else 1
    names = ("fwd", "bwd")[:num_dir]
    H = params["lstm"][0]["fwd"]["w_hh"].shape[0]
    DH = num_dir * H
    G = 4 * DH
    O = params["fc_w"].shape[1]

    def pack_cols(mats):
        # mats[d]: (rows, 4H) raw gate order (i,f,o,g) -> (rows, G) packed cols.
        cols = []
        for k in range(4):
            for d in range(num_dir):
                cols.append(np.asarray(mats[d][:, k * H:(k + 1) * H], np.float32))
        return np.concatenate(cols, axis=1)

    def pack_whh(mats):
        # mats[d]: (H, 4H) -> (DH, G) block-striped: rows d*H:(d+1)*H only feed
        # direction-d gate columns; everything else zero.
        out = np.zeros((DH, G), np.float32)
        for k in range(4):
            for d in range(num_dir):
                c0 = (k * num_dir + d) * H
                out[d * H:(d + 1) * H, c0:c0 + H] = np.asarray(
                    mats[d][:, k * H:(k + 1) * H], np.float32)
        return out

    sections = []
    layout = {"layers": [], "fc": None}
    row = [0]

    def add(a):
        a = np.asarray(a, np.float32)
        rows = _round_up(a.shape[0], 8)            # sublane-align every section
        padded = np.zeros((rows, G), np.float32)
        padded[:a.shape[0], :a.shape[1]] = a
        off = row[0]
        sections.append(padded)
        row[0] += rows
        return off, a.shape[0]

    for l in range(n_layers):
        lp = params["lstm"][l]
        wih_off, wih_rows = add(pack_cols([lp[n]["w_ih"] for n in names]))
        whh_off, _ = add(pack_whh([lp[n]["w_hh"] for n in names]))
        b_off, _ = add(pack_cols(
            [np.asarray(lp[n]["b"], np.float32).reshape(1, 4 * H) for n in names]))
        layout["layers"].append((wih_off, wih_rows, whh_off, b_off))

    fcw = np.zeros((DH, G), np.float32)
    fcw[:, :O] = np.asarray(params["fc_w"], np.float32)
    fcb = np.zeros((1, G), np.float32)
    fcb[0, :O] = np.asarray(params["fc_b"], np.float32)
    fcw_off, _ = add(fcw)
    fcb_off, _ = add(fcb)
    layout["fc"] = (fcw_off, fcb_off)

    slab = jnp.asarray(np.concatenate(sections, axis=0))   # (rows_total, G) f32
    return slab, layout, dict(H=H, DH=DH, G=G, O=O)


# ----------------------------------------------------------------------------
# Fused kernel factory.
# ----------------------------------------------------------------------------
def _make_kernel(*, S, BP, VOCAB_P, H, O, n_layers, bidirectional, layout,
                 matmul_dtype):
    num_dir = 2 if bidirectional else 1
    DH = num_dir * H
    G = 4 * DH
    SBP = S * BP
    f32 = jnp.float32
    md = matmul_dtype

    def kernel(ids_ref, emb_ref, slab_ref, out_ref):
        # ----- hoisted lane masks (built once; compare/or only, no vector div) --
        if bidirectional:
            col = jax.lax.broadcasted_iota(jnp.int32, (1, G), 1)
            gmask = (col >= 0) & (col < H)                 # first fwd block
            for k in range(1, 4):
                lo = (k * num_dir) * H
                gmask |= (col >= lo) & (col < lo + H)      # remaining fwd blocks
            colh = jax.lax.broadcasted_iota(jnp.int32, (1, DH), 1)
            hmask = colh < H                               # fwd half of the state

        # ----- fused embedding gather: one-hot matmul (kept in f32 => exact) ---
        ids = ids_ref[...]                                 # (S*BP, 1) int32
        viota = jax.lax.broadcasted_iota(jnp.int32, (SBP, VOCAB_P), 1)
        onehot = (viota == ids).astype(f32)                # (S*BP, VOCAB_P)
        cur = jnp.dot(onehot, emb_ref[...], preferred_element_type=f32)  # (S*BP, E)
        # TODO(synk): training-mode dropout on the embedded input not implemented.

        final_h = None
        for l in range(n_layers):
            wih_off, wih_rows, whh_off, b_off = layout["layers"][l]
            # Weight casts to the MXU dtype hoisted OUT of the time loop.
            wih = slab_ref[wih_off:wih_off + wih_rows, :].astype(md)
            whh = slab_ref[whh_off:whh_off + DH, :].astype(md)
            bias = slab_ref[b_off:b_off + 1, :]            # (1, G) f32

            # Input projection for ALL timesteps and BOTH directions: 1 matmul.
            pre_all = jnp.dot(cur.astype(md), wih,
                              preferred_element_type=f32) + bias       # (S*BP, G)
            pre = [pre_all[t * BP:(t + 1) * BP, :] for t in range(S)]   # aligned

            # Interleaved fwd/bwd recurrence: fwd step t and bwd step S-1-t share
            # one fused (BP,DH)x(DH,G) MXU sequence per step.
            hcat = jnp.zeros((BP, DH), f32)
            ccat = jnp.zeros((BP, DH), f32)
            hsteps = [None] * S
            for t in range(S):                             # statically unrolled
                if bidirectional:
                    pre_t = jnp.where(gmask, pre[t], pre[S - 1 - t])
                else:
                    pre_t = pre[t]
                gates = pre_t + jnp.dot(hcat.astype(md), whh,
                                        preferred_element_type=f32)     # (BP, G)
                sg = jax.nn.sigmoid(gates)                 # full-vreg EUP pass
                th = jnp.tanh(gates)                       # full-vreg EUP pass
                ccat = sg[:, DH:2 * DH] * ccat + sg[:, :DH] * th[:, 3 * DH:]
                hcat = sg[:, 2 * DH:3 * DH] * jnp.tanh(ccat)
                hsteps[t] = hcat

            # [h_f(T-1) | h_b(0)] == cat(hidden[-2], hidden[-1]) for this layer.
            final_h = hsteps[S - 1]

            if l + 1 < n_layers:
                # Re-pair the directions per time index and time-stack them so the
                # next layer's input projection is again a single matmul.
                if bidirectional:
                    outs = [jnp.where(hmask, hsteps[t], hsteps[S - 1 - t])
                            for t in range(S)]
                else:
                    outs = hsteps
                cur = jnp.concatenate(outs, axis=0)        # (S*BP, DH)
                # TODO(synk): inter-layer dropout (nn.LSTM dropout=p) omitted (eval).

        # ----- final Linear: input is already the lane-contiguous final state ---
        fcw_off, fcb_off = layout["fc"]
        fcw = slab_ref[fcw_off:fcw_off + DH, :].astype(md)  # (DH, G), cols>=O zero
        fcb = slab_ref[fcb_off:fcb_off + 1, :]              # (1, G)
        logits = jnp.dot(final_h.astype(md), fcw, preferred_element_type=f32)
        out_ref[...] = logits[:, :O] + fcb[:, :O]

    return kernel


# ----------------------------------------------------------------------------
# Forward builder (single pallas_call, 3 inputs: ids / padded embedding / slab).
# ----------------------------------------------------------------------------
def make_forward(*, layout, S, B, H, O, n_layers, bidirectional, vocab_p,
                 matmul_dtype=jnp.bfloat16):
    BP = _round_up(max(B, 1), 8)                 # pad batch to sublane width
    kernel = _make_kernel(S=S, BP=BP, VOCAB_P=vocab_p, H=H, O=O,
                          n_layers=n_layers, bidirectional=bidirectional,
                          layout=layout, matmul_dtype=matmul_dtype)

    def forward(text, emb_padded, slab):
        ids = jnp.zeros((S, BP), jnp.int32).at[:, :B].set(text.astype(jnp.int32))
        ids = ids.reshape(S * BP, 1)
        out = pl.pallas_call(
            kernel,
            out_shape=jax.ShapeDtypeStruct((BP, O), jnp.float32),
            in_specs=[pl.BlockSpec(ids.shape, lambda: (0, 0)),
                      pl.BlockSpec(emb_padded.shape, lambda: (0, 0)),
                      pl.BlockSpec(slab.shape, lambda: (0, 0))],
            out_specs=pl.BlockSpec((BP, O), lambda: (0, 0)),
            # Explicit limit; at toy size everything is resident. For large H /
            # fused vocab tables a per-layer K-tiled BlockSpec path (and on v7x a
            # parallel batch grid axis for the 2nd TensorCore) would be added here.
            compiler_params=pltpu.CompilerParams(
                vmem_limit_bytes=32 * 1024 * 1024),
        )(ids, emb_padded, slab)
        return out[:B]

    return forward


# ----------------------------------------------------------------------------
# Pure-JAX reference (f32) with identical parameter conventions.
# ----------------------------------------------------------------------------
def reference_forward(text, params, n_layers, bidirectional):
    S, B = text.shape
    num_dir = 2 if bidirectional else 1
    names = ("fwd", "bwd")[:num_dir]
    H = params["lstm"][0]["fwd"]["w_hh"].shape[0]
    x = params["embedding"][text]                            # (S, B, E)
    finals = []
    for l in range(n_layers):
        dirs_out = []
        finals = []
        for d, name in enumerate(names):
            p = params["lstm"][l][name]
            w_ih, w_hh, b = p["w_ih"], p["w_hh"], p["b"]
            h = jnp.zeros((B, H), jnp.float32)
            c = jnp.zeros((B, H), jnp.float32)
            hs = [None] * S
            order = range(S) if d == 0 else range(S - 1, -1, -1)
            for t in order:
                g = x[t] @ w_ih + h @ w_hh + b
                i = jax.nn.sigmoid(g[:, :H])
                f = jax.nn.sigmoid(g[:, H:2 * H])
                o = jax.nn.sigmoid(g[:, 2 * H:3 * H])
                gg = jnp.tanh(g[:, 3 * H:])
                c = f * c + i * gg
                h = o * jnp.tanh(c)
                hs[t] = h
            dirs_out.append(jnp.stack(hs, axis=0))
            finals.append(h)
        x = jnp.concatenate(dirs_out, axis=-1)
    hidden = jnp.concatenate(finals, axis=-1) if bidirectional else finals[0]
    return hidden @ params["fc_w"] + params["fc_b"]


# ----------------------------------------------------------------------------
# Deterministic synthetic parameter init (gate order (i, f, o, g), combined bias).
# ----------------------------------------------------------------------------
def init_params(key, vocab, embed_dim, hidden_dim, output_dim, n_layers,
                bidirectional):
    keys = jax.random.split(key, 3 + 6 * n_layers)
    k = iter(keys)
    scale = 0.1
    params = {
        "embedding": scale * jax.random.normal(next(k), (vocab, embed_dim),
                                               jnp.float32),
        "lstm": [],
    }
    num_dir = 2 if bidirectional else 1
    for layer in range(n_layers):
        in_dim = embed_dim if layer == 0 else hidden_dim * num_dir
        layer_p = {}
        for _, name in zip(range(num_dir), ("fwd", "bwd")):
            layer_p[name] = {
                "w_ih": scale * jax.random.normal(next(k), (in_dim, 4 * hidden_dim),
                                                  jnp.float32),
                "w_hh": scale * jax.random.normal(next(k), (hidden_dim, 4 * hidden_dim),
                                                  jnp.float32),
                "b": scale * jax.random.normal(next(k), (4 * hidden_dim,),
                                               jnp.float32),
            }
        params["lstm"].append(layer_p)
    fc_in = hidden_dim * num_dir
    params["fc_w"] = scale * jax.random.normal(next(k), (fc_in, output_dim),
                                               jnp.float32)
    params["fc_b"] = scale * jax.random.normal(next(k), (output_dim,), jnp.float32)
    return params


if __name__ == "__main__":
    VOCAB, EMB, HID, OUT = 50, 32, 32, 8
    N_LAYERS, BIDIR = 2, True
    SEQ, BATCH = 8, 2

    key = jax.random.PRNGKey(0)
    pkey, tkey = jax.random.split(key)
    params = init_params(pkey, VOCAB, EMB, HID, OUT, N_LAYERS, BIDIR)
    text = jax.random.randint(tkey, (SEQ, BATCH), 0, VOCAB, dtype=jnp.int32)

    # One-time packing: weight slab + padded embedding table.
    slab, layout, dims = pack_params(params, N_LAYERS, BIDIR)
    VOCAB_P = _round_up(VOCAB, 8)
    emb_padded = jnp.zeros((VOCAB_P, EMB), jnp.float32).at[:VOCAB].set(
        params["embedding"])

    common = dict(layout=layout, S=SEQ, B=BATCH, H=dims["H"], O=dims["O"],
                  n_layers=N_LAYERS, bidirectional=BIDIR, vocab_p=VOCAB_P)

    # Correctness check: f32-MXU kernel vs pure-JAX f32 reference.
    fwd_f32 = jax.jit(make_forward(matmul_dtype=jnp.float32, **common))
    logits_f32 = fwd_f32(text, emb_padded, slab)
    jax.block_until_ready(logits_f32)
    ref = reference_forward(text, params, N_LAYERS, BIDIR)
    max_err = float(jnp.max(jnp.abs(logits_f32 - ref)))
    assert max_err < 1e-3, f"kernel/reference mismatch: max |diff| = {max_err}"

    # Performance path: bf16 MXU inputs (f32 accumulate, f32 element-wise).
    fwd = jax.jit(make_forward(matmul_dtype=jnp.bfloat16, **common))
    logits = fwd(text, emb_padded, slab)
    jax.block_until_ready(logits)
    assert logits.shape == (BATCH, OUT)
    assert bool(jnp.all(jnp.isfinite(logits)))
    print("KERNEL_OK")
</pallas_src>

<mosaic_0001>
module attributes {stable_mosaic.version = 11 : i64} {
  func.func @kernel(%arg0: memref<64x1xi32, #tpu.memory_space<vmem>>, %arg1: memref<56x32xf32, #tpu.memory_space<vmem>>, %arg2: memref<312x256xf32, #tpu.memory_space<vmem>>, %arg3: memref<8x8xf32, #tpu.memory_space<vmem>>) attributes {dimension_semantics = [], scalar_prefetch = 0 : i64, scratch_operands = 0 : i64, tpu.core_type = #tpu.core_type<tc>} {
    %0 = tpu.iota {dimensions = array<i32: 1>} : vector<1x256xi32>
    %c0_i32 = arith.constant 0 : i32
    %1 = vector.broadcast %c0_i32 : i32 to vector<1x256xi32>
    %2 = arith.cmpi sge, %0, %1 : vector<1x256xi32>
    %c32_i32 = arith.constant 32 : i32
    %3 = vector.broadcast %c32_i32 : i32 to vector<1x256xi32>
    %4 = arith.cmpi slt, %0, %3 : vector<1x256xi32>
    %5 = arith.andi %2, %4 : vector<1x256xi1>
    %c64_i32 = arith.constant 64 : i32
    %6 = vector.broadcast %c64_i32 : i32 to vector<1x256xi32>
    %7 = arith.cmpi sge, %0, %6 : vector<1x256xi32>
    %c96_i32 = arith.constant 96 : i32
    %8 = vector.broadcast %c96_i32 : i32 to vector<1x256xi32>
    %9 = arith.cmpi slt, %0, %8 : vector<1x256xi32>
    %10 = arith.andi %7, %9 : vector<1x256xi1>
    %11 = arith.ori %5, %10 : vector<1x256xi1>
    %c128_i32 = arith.constant 128 : i32
    %12 = vector.broadcast %c128_i32 : i32 to vector<1x256xi32>
    %13 = arith.cmpi sge, %0, %12 : vector<1x256xi32>
    %c160_i32 = arith.constant 160 : i32
    %14 = vector.broadcast %c160_i32 : i32 to vector<1x256xi32>
    %15 = arith.cmpi slt, %0, %14 : vector<1x256xi32>
    %16 = arith.andi %13, %15 : vector<1x256xi1>
    %17 = arith.ori %11, %16 : vector<1x256xi1>
    %c192_i32 = arith.constant 192 : i32
    %18 = vector.broadcast %c192_i32 : i32 to vector<1x256xi32>
    %19 = arith.cmpi sge, %0, %18 : vector<1x256xi32>
    %c224_i32 = arith.constant 224 : i32
    %20 = vector.broadcast %c224_i32 : i32 to vector<1x256xi32>
    %21 = arith.cmpi slt, %0, %20 : vector<1x256xi32>
    %22 = arith.andi %19, %21 : vector<1x256xi1>
    %23 = arith.ori %17, %22 : vector<1x256xi1>
    %24 = tpu.iota {dimensions = array<i32: 1>} : vector<1x64xi32>
    %c32_i32_0 = arith.constant 32 : i32
    %25 = vector.broadcast %c32_i32_0 : i32 to vector<1x64xi32>
    %26 = arith.cmpi slt, %24, %25 : vector<1x64xi32>
    %c0 = arith.constant 0 : index
    %c0_1 = arith.constant 0 : index
    %27 = vector.load %arg0[%c0, %c0_1] : memref<64x1xi32, #tpu.memory_space<vmem>>, vector<64x1xi32>
    %28 = tpu.iota {dimensions = array<i32: 1>} : vector<64x56xi32>
    %29 = vector.broadcast %27 : vector<64x1xi32> to vector<64x56xi32>
    %30 = arith.cmpi eq, %28, %29 : vector<64x56xi32>
    %31 = arith.extui %30 : vector<64x56xi1> to vector<64x56xi32>
    %32 = arith.sitofp %31 : vector<64x56xi32> to vector<64x56xf32>
    %c0_2 = arith.constant 0 : index
    %c0_3 = arith.constant 0 : index
    %33 = vector.load %arg1[%c0_2, %c0_3] : memref<56x32xf32, #tpu.memory_space<vmem>>, vector<56x32xf32>
    %cst = arith.constant dense<0.000000e+00> : vector<64x32xf32>
    %34 = tpu.matmul %32, %33, %cst {dimension_numbers = #tpu.dot_dimension_numbers<[1], [0], [0], [1], [0, 0, 1, 1], [], []>} : vector<64x56xf32>, vector<56x32xf32>, vector<64x32xf32> -> vector<64x32xf32>
    %c0_4 = arith.constant 0 : index
    %c0_5 = arith.constant 0 : index
    %35 = vector.load %arg2[%c0_4, %c0_5] : memref<312x256xf32, #tpu.memory_space<vmem>>, vector<32x256xf32>
    %c32 = arith.constant 32 : index
    %c0_6 = arith.constant 0 : index
    %36 = vector.load %arg2[%c32, %c0_6] : memref<312x256xf32, #tpu.memory_space<vmem>>, vector<64x256xf32>
    %c96 = arith.constant 96 : index
    %c0_7 = arith.constant 0 : index
    %37 = vector.load %arg2[%c96, %c0_7] : memref<312x256xf32, #tpu.memory_space<vmem>>, vector<1x256xf32>
    %cst_8 = arith.constant dense<0.000000e+00> : vector<64x256xf32>
    %38 = tpu.matmul %34, %35, %cst_8 {dimension_numbers = #tpu.dot_dimension_numbers<[1], [0], [0], [1], [0, 0, 1, 1], [], []>} : vector<64x32xf32>, vector<32x256xf32>, vector<64x256xf32> -> vector<64x256xf32>
    %39 = vector.broadcast %37 : vector<1x256xf32> to vector<64x256xf32>
    %40 = arith.addf %38, %39 : vector<64x256xf32>
    %41 = vector.extract_strided_slice %40 {offsets = [0, 0], sizes = [8, 256], strides = [1, 1]} : vector<64x256xf32> to vector<8x256xf32>
    %42 = vector.extract_strided_slice %40 {offsets = [8, 0], sizes = [8, 256], strides = [1, 1]} : vector<64x256xf32> to vector<8x256xf32>
    %43 = vector.extract_strided_slice %40 {offsets = [16, 0], sizes = [8, 256], strides = [1, 1]} : vector<64x256xf32> to vector<8x256xf32>
    %44 = vector.extract_strided_slice %40 {offsets = [24, 0], sizes = [8, 256], strides = [1, 1]} : vector<64x256xf32> to vector<8x256xf32>
    %45 = vector.extract_strided_slice %40 {offsets = [32, 0], sizes = [8, 256], strides = [1, 1]} : vector<64x256xf32> to vector<8x256xf32>
    %46 = vector.extract_strided_slice %40 {offsets = [40, 0], sizes = [8, 256], strides = [1, 1]} : vector<64x256xf32> to vector<8x256xf32>
    %47 = vector.extract_strided_slice %40 {offsets = [48, 0], sizes = [8, 256], strides = [1, 1]} : vector<64x256xf32> to vector<8x256xf32>
    %48 = vector.extract_strided_slice %40 {offsets = [56, 0], sizes = [8, 256], strides = [1, 1]} : vector<64x256xf32> to vector<8x256xf32>
    %cst_9 = arith.constant 0.000000e+00 : f32
    %49 = vector.broadcast %cst_9 : f32 to vector<8x64xf32>
    %cst_10 = arith.constant 0.000000e+00 : f32
    %50 = vector.broadcast %cst_10 : f32 to vector<8x64xf32>
    %51 = vector.shape_cast %23 : vector<1x256xi1> to vector<1x256xi1>
    %52 = vector.broadcast %51 : vector<1x256xi1> to vector<8x256xi1>
    %53 = arith.select %52, %41, %48 : vector<8x256xi1>, vector<8x256xf32>
    %cst_11 = arith.constant dense<0.000000e+00> : vector<8x256xf32>
    %54 = tpu.matmul %49, %36, %cst_11 {dimension_numbers = #tpu.dot_dimension_numbers<[1], [0], [0], [1], [0, 0, 1, 1], [], []>} : vector<8x64xf32>, vector<64x256xf32>, vector<8x256xf32> -> vector<8x256xf32>
    %55 = arith.addf %53, %54 : vector<8x256xf32>
    %56 = arith.negf %55 : vector<8x256xf32>
    %57 = math.exp %56 : vector<8x256xf32>
    %cst_12 = arith.constant 1.000000e+00 : f32
    %58 = vector.broadcast %cst_12 : f32 to vector<8x256xf32>
    %59 = arith.addf %58, %57 : vector<8x256xf32>
    %60 = arith.divf %58, %59 : vector<8x256xf32>
    %61 = math.tanh %55 : vector<8x256xf32>
    %62 = vector.extract_strided_slice %60 {offsets = [0, 64], sizes = [8, 64], strides = [1, 1]} : vector<8x256xf32> to vector<8x64xf32>
    %63 = arith.mulf %62, %50 : vector<8x64xf32>
    %64 = vector.extract_strided_slice %60 {offsets = [0, 0], sizes = [8, 64], strides = [1, 1]} : vector<8x256xf32> to vector<8x64xf32>
    %65 = vector.extract_strided_slice %61 {offsets = [0, 192], sizes = [8, 64], strides = [1, 1]} : vector<8x256xf32> to vector<8x64xf32>
    %66 = arith.mulf %64, %65 : vector<8x64xf32>
    %67 = arith.addf %63, %66 : vector<8x64xf32>
    %68 = vector.extract_strided_slice %60 {offsets = [0, 128], sizes = [8, 64], strides = [1, 1]} : vector<8x256xf32> to vector<8x64xf32>
    %69 = math.tanh %67 : vector<8x64xf32>
    %70 = arith.mulf %68, %69 : vector<8x64xf32>
    %71 = vector.shape_cast %23 : vector<1x256xi1> to vector<1x256xi1>
    %72 = vector.broadcast %71 : vector<1x256xi1> to vector<8x256xi1>
    %73 = arith.select %72, %42, %47 : vector<8x256xi1>, vector<8x256xf32>
    %cst_13 = arith.constant dense<0.000000e+00> : vector<8x256xf32>
    %74 = tpu.matmul %70, %36, %cst_13 {dimension_numbers = #tpu.dot_dimension_numbers<[1], [0], [0], [1], [0, 0, 1, 1], [], []>} : vector<8x64xf32>, vector<64x256xf32>, vector<8x256xf32> -> vector<8x256xf32>
    %75 = arith.addf %73, %74 : vector<8x256xf32>
    %76 = arith.negf %75 : vector<8x256xf32>
    %77 = math.exp %76 : vector<8x256xf32>
    %cst_14 = arith.constant 1.000000e+00 : f32
    %78 = vector.broadcast %cst_14 : f32 to vector<8x256xf32>
    %79 = arith.addf %78, %77 : vector<8x256xf32>
    %80 = arith.divf %78, %79 : vector<8x256xf32>
    %81 = math.tanh %75 : vector<8x256xf32>
    %82 = vector.extract_strided_slice %80 {offsets = [0, 64], sizes = [8, 64], strides = [1, 1]} : vector<8x256xf32> to vector<8x64xf32>
    %83 = arith.mulf %82, %67 : vector<8x64xf32>
    %84 = vector.extract_strided_slice %80 {offsets = [0, 0], sizes = [8, 64], strides = [1, 1]} : vector<8x256xf32> to vector<8x64xf32>
    %85 = vector.extract_strided_slice %81 {offsets = [0, 192], sizes = [8, 64], strides = [1, 1]} : vector<8x256xf32> to vector<8x64xf32>
    %86 = arith.mulf %84, %85 : vector<8x64xf32>
    %87 = arith.addf %83, %86 : vector<8x64xf32>
    %88 = vector.extract_strided_slice %80 {offsets = [0, 128], sizes = [8, 64], strides = [1, 1]} : vector<8x256xf32> to vector<8x64xf32>
    %89 = math.tanh %87 : vector<8x64xf32>
    %90 = arith.mulf %88, %89 : vector<8x64xf32>
    %91 = vector.shape_cast %23 : vector<1x256xi1> to vector<1x256xi1>
    %92 = vector.broadcast %91 : vector<1x256xi1> to vector<8x256xi1>
    %93 = arith.select %92, %43, %46 : vector<8x256xi1>, vector<8x256xf32>
    %cst_15 = arith.constant dense<0.000000e+00> : vector<8x256xf32>
    %94 = tpu.matmul %90, %36, %cst_15 {dimension_numbers = #tpu.dot_dimension_numbers<[1], [0], [0], [1], [0, 0, 1, 1], [], []>} : vector<8x64xf32>, vector<64x256xf32>, vector<8x256xf32> -> vector<8x256xf32>
    %95 = arith.addf %93, %94 : vector<8x256xf32>
    %96 = arith.negf %95 : vector<8x256xf32>
    %97 = math.exp %96 : vector<8x256xf32>
    %cst_16 = arith.constant 1.000000e+00 : f32
    %98 = vector.broadcast %cst_16 : f32 to vector<8x256xf32>
    %99 = arith.addf %98, %97 : vector<8x256xf32>
    %100 = arith.divf %98, %99 : vector<8x256xf32>
    %101 = math.tanh %95 : vector<8x256xf32>
    %102 = vector.extract_strided_slice %100 {offsets = [0, 64], sizes = [8, 64], strides = [1, 1]} : vector<8x256xf32> to vector<8x64xf32>
    %103 = arith.mulf %102, %87 : vector<8x64xf32>
    %104 = vector.extract_strided_slice %100 {offsets = [0, 0], sizes = [8, 64], strides = [1, 1]} : vector<8x256xf32> to vector<8x64xf32>
    %105 = vector.extract_strided_slice %101 {offsets = [0, 192], sizes = [8, 64], strides = [1, 1]} : vector<8x256xf32> to vector<8x64xf32>
    %106 = arith.mulf %104, %105 : vector<8x64xf32>
    %107 = arith.addf %103, %106 : vector<8x64xf32>
    %108 = vector.extract_strided_slice %100 {offsets = [0, 128], sizes = [8, 64], strides = [1, 1]} : vector<8x256xf32> to vector<8x64xf32>
    %109 = math.tanh %107 : vector<8x64xf32>
    %110 = arith.mulf %108, %109 : vector<8x64xf32>
    %111 = vector.shape_cast %23 : vector<1x256xi1> to vector<1x256xi1>
    %112 = vector.broadcast %111 : vector<1x256xi1> to vector<8x256xi1>
    %113 = arith.select %112, %44, %45 : vector<8x256xi1>, vector<8x256xf32>
    %cst_17 = arith.constant dense<0.000000e+00> : vector<8x256xf32>
    %114 = tpu.matmul %110, %36, %cst_17 {dimension_numbers = #tpu.dot_dimension_numbers<[1], [0], [0], [1], [0, 0, 1, 1], [], []>} : vector<8x64xf32>, vector<64x256xf32>, vector<8x256xf32> -> vector<8x256xf32>
    %115 = arith.addf %113, %114 : vector<8x256xf32>
    %116 = arith.negf %115 : vector<8x256xf32>
    %117 = math.exp %116 : vector<8x256xf32>
    %cst_18 = arith.constant 1.000000e+00 : f32
    %118 = vector.broadcast %cst_18 : f32 to vector<8x256xf32>
    %119 = arith.addf %118, %117 : vector<8x256xf32>
    %120 = arith.divf %118, %119 : vector<8x256xf32>
    %121 = math.tanh %115 : vector<8x256xf32>
    %122 = vector.extract_strided_slice %120 {offsets = [0, 64], sizes = [8, 64], strides = [1, 1]} : vector<8x256xf32> to vector<8x64xf32>
    %123 = arith.mulf %122, %107 : vector<8x64xf32>
    %124 = vector.extract_strided_slice %120 {offsets = [0, 0], sizes = [8, 64], strides = [1, 1]} : vector<8x256xf32> to vector<8x64xf32>
    %125 = vector.extract_strided_slice %121 {offsets = [0, 192], sizes = [8, 64], strides = [1, 1]} : vector<8x256xf32> to vector<8x64xf32>
    %126 = arith.mulf %124, %125 : vector<8x64xf32>
    %127 = arith.addf %123, %126 : vector<8x64xf32>
    %128 = vector.extract_strided_slice %120 {offsets = [0, 128], sizes = [8, 64], strides = [1, 1]} : vector<8x256xf32> to vector<8x64xf32>
    %129 = math.tanh %127 : vector<8x64xf32>
    %130 = arith.mulf %128, %129 : vector<8x64xf32>
    %131 = vector.shape_cast %23 : vector<1x256xi1> to vector<1x256xi1>
    %132 = vector.broadcast %131 : vector<1x256xi1> to vector<8x256xi1>
    %133 = arith.select %132, %45, %44 : vector<8x256xi1>, vector<8x256xf32>
    %cst_19 = arith.constant dense<0.000000e+00> : vector<8x256xf32>
    %134 = tpu.matmul %130, %36, %cst_19 {dimension_numbers = #tpu.dot_dimension_numbers<[1], [0], [0], [1], [0, 0, 1, 1], [], []>} : vector<8x64xf32>, vector<64x256xf32>, vector<8x256xf32> -> vector<8x256xf32>
    %135 = arith.addf %133, %134 : vector<8x256xf32>
    %136 = arith.negf %135 : vector<8x256xf32>
    %137 = math.exp %136 : vector<8x256xf32>
    %cst_20 = arith.constant 1.000000e+00 : f32
    %138 = vector.broadcast %cst_20 : f32 to vector<8x256xf32>
    %139 = arith.addf %138, %137 : vector<8x256xf32>
    %140 = arith.divf %138, %139 : vector<8x256xf32>
    %141 = math.tanh %135 : vector<8x256xf32>
    %142 = vector.extract_strided_slice %140 {offsets = [0, 64], sizes = [8, 64], strides = [1, 1]} : vector<8x256xf32> to vector<8x64xf32>
    %143 = arith.mulf %142, %127 : vector<8x64xf32>
    %144 = vector.extract_strided_slice %140 {offsets = [0, 0], sizes = [8, 64], strides = [1, 1]} : vector<8x256xf32> to vector<8x64xf32>
    %145 = vector.extract_strided_slice %141 {offsets = [0, 192], sizes = [8, 64], strides = [1, 1]} : vector<8x256xf32> to vector<8x64xf32>
    %146 = arith.mulf %144, %145 : vector<8x64xf32>
    %147 = arith.addf %143, %146 : vector<8x64xf32>
    %148 = vector.extract_strided_slice %140 {offsets = [0, 128], sizes = [8, 64], strides = [1, 1]} : vector<8x256xf32> to vector<8x64xf32>
    %149 = math.tanh %147 : vector<8x64xf32>
    %150 = arith.mulf %148, %149 : vector<8x64xf32>
    %151 = vector.shape_cast %23 : vector<1x256xi1> to vector<1x256xi1>
    %152 = vector.broadcast %151 : vector<1x256xi1> to vector<8x256xi1>
    %153 = arith.select %152, %46, %43 : vector<8x256xi1>, vector<8x256xf32>
    %cst_21 = arith.constant dense<0.000000e+00> : vector<8x256xf32>
    %154 = tpu.matmul %150, %36, %cst_21 {dimension_numbers = #tpu.dot_dimension_numbers<[1], [0], [0], [1], [0, 0, 1, 1], [], []>} : vector<8x64xf32>, vector<64x256xf32>, vector<8x256xf32> -> vector<8x256xf32>
    %155 = arith.addf %153, %154 : vector<8x256xf32>
    %156 = arith.negf %155 : vector<8x256xf32>
    %157 = math.exp %156 : vector<8x256xf32>
    %cst_22 = arith.constant 1.000000e+00 : f32
    %158 = vector.broadcast %cst_22 : f32 to vector<8x256xf32>
    %159 = arith.addf %158, %157 : vector<8x256xf32>
    %160 = arith.divf %158, %159 : vector<8x256xf32>
    %161 = math.tanh %155 : vector<8x256xf32>
    %162 = vector.extract_strided_slice %160 {offsets = [0, 64], sizes = [8, 64], strides = [1, 1]} : vector<8x256xf32> to vector<8x64xf32>
    %163 = arith.mulf %162, %147 : vector<8x64xf32>
    %164 = vector.extract_strided_slice %160 {offsets = [0, 0], sizes = [8, 64], strides = [1, 1]} : vector<8x256xf32> to vector<8x64xf32>
    %165 = vector.extract_strided_slice %161 {offsets = [0, 192], sizes = [8, 64], strides = [1, 1]} : vector<8x256xf32> to vector<8x64xf32>
    %166 = arith.mulf %164, %165 : vector<8x64xf32>
    %167 = arith.addf %163, %166 : vector<8x64xf32>
    %168 = vector.extract_strided_slice %160 {offsets = [0, 128], sizes = [8, 64], strides = [1, 1]} : vector<8x256xf32> to vector<8x64xf32>
    %169 = math.tanh %167 : vector<8x64xf32>
    %170 = arith.mulf %168, %169 : vector<8x64xf32>
    %171 = vector.shape_cast %23 : vector<1x256xi1> to vector<1x256xi1>
    %172 = vector.broadcast %171 : vector<1x256xi1> to vector<8x256xi1>
    %173 = arith.select %172, %47, %42 : vector<8x256xi1>, vector<8x256xf32>
    %cst_23 = arith.constant dense<0.000000e+00> : vector<8x256xf32>
    %174 = tpu.matmul %170, %36, %cst_23 {dimension_numbers = #tpu.dot_dimension_numbers<[1], [0], [0], [1], [0, 0, 1, 1], [], []>} : vector<8x64xf32>, vector<64x256xf32>, vector<8x256xf32> -> vector<8x256xf32>
    %175 = arith.addf %173, %174 : vector<8x256xf32>
    %176 = arith.negf %175 : vector<8x256xf32>
    %177 = math.exp %176 : vector<8x256xf32>
    %cst_24 = arith.constant 1.000000e+00 : f32
    %178 = vector.broadcast %cst_24 : f32 to vector<8x256xf32>
    %179 = arith.addf %178, %177 : vector<8x256xf32>
    %180 = arith.divf %178, %179 : vector<8x256xf32>
    %181 = math.tanh %175 : vector<8x256xf32>
    %182 = vector.extract_strided_slice %180 {offsets = [0, 64], sizes = [8, 64], strides = [1, 1]} : vector<8x256xf32> to vector<8x64xf32>
    %183 = arith.mulf %182, %167 : vector<8x64xf32>
    %184 = vector.extract_strided_slice %180 {offsets = [0, 0], sizes = [8, 64], strides = [1, 1]} : vector<8x256xf32> to vector<8x64xf32>
    %185 = vector.extract_strided_slice %181 {offsets = [0, 192], sizes = [8, 64], strides = [1, 1]} : vector<8x256xf32> to vector<8x64xf32>
    %186 = arith.mulf %184, %185 : vector<8x64xf32>
    %187 = arith.addf %183, %186 : vector<8x64xf32>
    %188 = vector.extract_strided_slice %180 {offsets = [0, 128], sizes = [8, 64], strides = [1, 1]} : vector<8x256xf32> to vector<8x64xf32>
    %189 = math.tanh %187 : vector<8x64xf32>
    %190 = arith.mulf %188, %189 : vector<8x64xf32>
    %191 = vector.shape_cast %23 : vector<1x256xi1> to vector<1x256xi1>
    %192 = vector.broadcast %191 : vector<1x256xi1> to vector<8x256xi1>
    %193 = arith.select %192, %48, %41 : vector<8x256xi1>, vector<8x256xf32>
    %cst_25 = arith.constant dense<0.000000e+00> : vector<8x256xf32>
    %194 = tpu.matmul %190, %36, %cst_25 {dimension_numbers = #tpu.dot_dimension_numbers<[1], [0], [0], [1], [0, 0, 1, 1], [], []>} : vector<8x64xf32>, vector<64x256xf32>, vector<8x256xf32> -> vector<8x256xf32>
    %195 = arith.addf %193, %194 : vector<8x256xf32>
    %196 = arith.negf %195 : vector<8x256xf32>
    %197 = math.exp %196 : vector<8x256xf32>
    %cst_26 = arith.constant 1.000000e+00 : f32
    %198 = vector.broadcast %cst_26 : f32 to vector<8x256xf32>
    %199 = arith.addf %198, %197 : vector<8x256xf32>
    %200 = arith.divf %198, %199 : vector<8x256xf32>
    %201 = math.tanh %195 : vector<8x256xf32>
    %202 = vector.extract_strided_slice %200 {offsets = [0, 64], sizes = [8, 64], strides = [1, 1]} : vector<8x256xf32> to vector<8x64xf32>
    %203 = arith.mulf %202, %187 : vector<8x64xf32>
    %204 = vector.extract_strided_slice %200 {offsets = [0, 0], sizes = [8, 64], strides = [1, 1]} : vector<8x256xf32> to vector<8x64xf32>
    %205 = vector.extract_strided_slice %201 {offsets = [0, 192], sizes = [8, 64], strides = [1, 1]} : vector<8x256xf32> to vector<8x64xf32>
    %206 = arith.mulf %204, %205 : vector<8x64xf32>
    %207 = arith.addf %203, %206 : vector<8x64xf32>
    %208 = vector.extract_strided_slice %200 {offsets = [0, 128], sizes = [8, 64], strides = [1, 1]} : vector<8x256xf32> to vector<8x64xf32>
    %209 = math.tanh %207 : vector<8x64xf32>
    %210 = arith.mulf %208, %209 : vector<8x64xf32>
    %211 = vector.shape_cast %26 : vector<1x64xi1> to vector<1x64xi1>
    %212 = vector.broadcast %211 : vector<1x64xi1> to vector<8x64xi1>
    %213 = arith.select %212, %70, %210 : vector<8x64xi1>, vector<8x64xf32>
    %214 = vector.shape_cast %26 : vector<1x64xi1> to vector<1x64xi1>
    %215 = vector.broadcast %214 : vector<1x64xi1> to vector<8x64xi1>
    %216 = arith.select %215, %90, %190 : vector<8x64xi1>, vector<8x64xf32>
    %217 = vector.shape_cast %26 : vector<1x64xi1> to vector<1x64xi1>
    %218 = vector.broadcast %217 : vector<1x64xi1> to vector<8x64xi1>
    %219 = arith.select %218, %110, %170 : vector<8x64xi1>, vector<8x64xf32>
    %220 = vector.shape_cast %26 : vector<1x64xi1> to vector<1x64xi1>
    %221 = vector.broadcast %220 : vector<1x64xi1> to vector<8x64xi1>
    %222 = arith.select %221, %130, %150 : vector<8x64xi1>, vector<8x64xf32>
    %223 = vector.shape_cast %26 : vector<1x64xi1> to vector<1x64xi1>
    %224 = vector.broadcast %223 : vector<1x64xi1> to vector<8x64xi1>
    %225 = arith.select %224, %150, %130 : vector<8x64xi1>, vector<8x64xf32>
    %226 = vector.shape_cast %26 : vector<1x64xi1> to vector<1x64xi1>
    %227 = vector.broadcast %226 : vector<1x64xi1> to vector<8x64xi1>
    %228 = arith.select %227, %170, %110 : vector<8x64xi1>, vector<8x64xf32>
    %229 = vector.shape_cast %26 : vector<1x64xi1> to vector<1x64xi1>
    %230 = vector.broadcast %229 : vector<1x64xi1> to vector<8x64xi1>
    %231 = arith.select %230, %190, %90 : vector<8x64xi1>, vector<8x64xf32>
    %232 = vector.shape_cast %26 : vector<1x64xi1> to vector<1x64xi1>
    %233 = vector.broadcast %232 : vector<1x64xi1> to vector<8x64xi1>
    %234 = arith.select %233, %210, %70 : vector<8x64xi1>, vector<8x64xf32>
    %235 = tpu.concatenate %213, %216, %219, %222, %225, %228, %231, %234 in 0 : vector<8x64xf32>, vector<8x64xf32>, vector<8x64xf32>, vector<8x64xf32>, vector<8x64xf32>, vector<8x64xf32>, vector<8x64xf32>, vector<8x64xf32> -> vector<64x64xf32>
    %c104 = arith.constant 104 : index
    %c0_27 = arith.constant 0 : index
    %236 = vector.load %arg2[%c104, %c0_27] : memref<312x256xf32, #tpu.memory_space<vmem>>, vector<64x256xf32>
    %c168 = arith.constant 168 : index
    %c0_28 = arith.constant 0 : index
    %237 = vector.load %arg2[%c168, %c0_28] : memref<312x256xf32, #tpu.memory_space<vmem>>, vector<64x256xf32>
    %c232 = arith.constant 232 : index
    %c0_29 = arith.constant 0 : index
    %238 = vector.load %arg2[%c232, %c0_29] : memref<312x256xf32, #tpu.memory_space<vmem>>, vector<1x256xf32>
    %cst_30 = arith.constant dense<0.000000e+00> : vector<64x256xf32>
    %239 = tpu.matmul %235, %236, %cst_30 {dimension_numbers = #tpu.dot_dimension_numbers<[1], [0], [0], [1], [0, 0, 1, 1], [], []>} : vector<64x64xf32>, vector<64x256xf32>, vector<64x256xf32> -> vector<64x256xf32>
    %240 = vector.broadcast %238 : vector<1x256xf32> to vector<64x256xf32>
    %241 = arith.addf %239, %240 : vector<64x256xf32>
    %242 = vector.extract_strided_slice %241 {offsets = [0, 0], sizes = [8, 256], strides = [1, 1]} : vector<64x256xf32> to vector<8x256xf32>
    %243 = vector.extract_strided_slice %241 {offsets = [8, 0], sizes = [8, 256], strides = [1, 1]} : vector<64x256xf32> to vector<8x256xf32>
    %244 = vector.extract_strided_slice %241 {offsets = [16, 0], sizes = [8, 256], strides = [1, 1]} : vector<64x256xf32> to vector<8x256xf32>
    %245 = vector.extract_strided_slice %241 {offsets = [24, 0], sizes = [8, 256], strides = [1, 1]} : vector<64x256xf32> to vector<8x256xf32>
    %246 = vector.extract_strided_slice %241 {offsets = [32, 0], sizes = [8, 256], strides = [1, 1]} : vector<64x256xf32> to vector<8x256xf32>
    %247 = vector.extract_strided_slice %241 {offsets = [40, 0], sizes = [8, 256], strides = [1, 1]} : vector<64x256xf32> to vector<8x256xf32>
    %248 = vector.extract_strided_slice %241 {offsets = [48, 0], sizes = [8, 256], strides = [1, 1]} : vector<64x256xf32> to vector<8x256xf32>
    %249 = vector.extract_strided_slice %241 {offsets = [56, 0], sizes = [8, 256], strides = [1, 1]} : vector<64x256xf32> to vector<8x256xf32>
    %cst_31 = arith.constant 0.000000e+00 : f32
    %250 = vector.broadcast %cst_31 : f32 to vector<8x64xf32>
    %cst_32 = arith.constant 0.000000e+00 : f32
    %251 = vector.broadcast %cst_32 : f32 to vector<8x64xf32>
    %252 = vector.shape_cast %23 : vector<1x256xi1> to vector<1x256xi1>
    %253 = vector.broadcast %252 : vector<1x256xi1> to vector<8x256xi1>
    %254 = arith.select %253, %242, %249 : vector<8x256xi1>, vector<8x256xf32>
    %cst_33 = arith.constant dense<0.000000e+00> : vector<8x256xf32>
    %255 = tpu.matmul %250, %237, %cst_33 {dimension_numbers = #tpu.dot_dimension_numbers<[1], [0], [0], [1], [0, 0, 1, 1], [], []>} : vector<8x64xf32>, vector<64x256xf32>, vector<8x256xf32> -> vector<8x256xf32>
    %256 = arith.addf %254, %255 : vector<8x256xf32>
    %257 = arith.negf %256 : vector<8x256xf32>
    %258 = math.exp %257 : vector<8x256xf32>
    %cst_34 = arith.constant 1.000000e+00 : f32
    %259 = vector.broadcast %cst_34 : f32 to vector<8x256xf32>
    %260 = arith.addf %259, %258 : vector<8x256xf32>
    %261 = arith.divf %259, %260 : vector<8x256xf32>
    %262 = math.tanh %256 : vector<8x256xf32>
    %263 = vector.extract_strided_slice %261 {offsets = [0, 64], sizes = [8, 64], strides = [1, 1]} : vector<8x256xf32> to vector<8x64xf32>
    %264 = arith.mulf %263, %251 : vector<8x64xf32>
    %265 = vector.extract_strided_slice %261 {offsets = [0, 0], sizes = [8, 64], strides = [1, 1]} : vector<8x256xf32> to vector<8x64xf32>
    %266 = vector.extract_strided_slice %262 {offsets = [0, 192], sizes = [8, 64], strides = [1, 1]} : vector<8x256xf32> to vector<8x64xf32>
    %267 = arith.mulf %265, %266 : vector<8x64xf32>
    %268 = arith.addf %264, %267 : vector<8x64xf32>
    %269 = vector.extract_strided_slice %261 {offsets = [0, 128], sizes = [8, 64], strides = [1, 1]} : vector<8x256xf32> to vector<8x64xf32>
    %270 = math.tanh %268 : vector<8x64xf32>
    %271 = arith.mulf %269, %270 : vector<8x64xf32>
    %272 = vector.shape_cast %23 : vector<1x256xi1> to vector<1x256xi1>
    %273 = vector.broadcast %272 : vector<1x256xi1> to vector<8x256xi1>
    %274 = arith.select %273, %243, %248 : vector<8x256xi1>, vector<8x256xf32>
    %cst_35 = arith.constant dense<0.000000e+00> : vector<8x256xf32>
    %275 = tpu.matmul %271, %237, %cst_35 {dimension_numbers = #tpu.dot_dimension_numbers<[1], [0], [0], [1], [0, 0, 1, 1], [], []>} : vector<8x64xf32>, vector<64x256xf32>, vector<8x256xf32> -> vector<8x256xf32>
    %276 = arith.addf %274, %275 : vector<8x256xf32>
    %277 = arith.negf %276 : vector<8x256xf32>
    %278 = math.exp %277 : vector<8x256xf32>
    %cst_36 = arith.constant 1.000000e+00 : f32
    %279 = vector.broadcast %cst_36 : f32 to vector<8x256xf32>
    %280 = arith.addf %279, %278 : vector<8x256xf32>
    %281 = arith.divf %279, %280 : vector<8x256xf32>
    %282 = math.tanh %276 : vector<8x256xf32>
    %283 = vector.extract_strided_slice %281 {offsets = [0, 64], sizes = [8, 64], strides = [1, 1]} : vector<8x256xf32> to vector<8x64xf32>
    %284 = arith.mulf %283, %268 : vector<8x64xf32>
    %285 = vector.extract_strided_slice %281 {offsets = [0, 0], sizes = [8, 64], strides = [1, 1]} : vector<8x256xf32> to vector<8x64xf32>
    %286 = vector.extract_strided_slice %282 {offsets = [0, 192], sizes = [8, 64], strides = [1, 1]} : vector<8x256xf32> to vector<8x64xf32>
    %287 = arith.mulf %285, %286 : vector<8x64xf32>
    %288 = arith.addf %284, %287 : vector<8x64xf32>
    %289 = vector.extract_strided_slice %281 {offsets = [0, 128], sizes = [8, 64], strides = [1, 1]} : vector<8x256xf32> to vector<8x64xf32>
    %290 = math.tanh %288 : vector<8x64xf32>
    %291 = arith.mulf %289, %290 : vector<8x64xf32>
    %292 = vector.shape_cast %23 : vector<1x256xi1> to vector<1x256xi1>
    %293 = vector.broadcast %292 : vector<1x256xi1> to vector<8x256xi1>
    %294 = arith.select %293, %244, %247 : vector<8x256xi1>, vector<8x256xf32>
    %cst_37 = arith.constant dense<0.000000e+00> : vector<8x256xf32>
    %295 = tpu.matmul %291, %237, %cst_37 {dimension_numbers = #tpu.dot_dimension_numbers<[1], [0], [0], [1], [0, 0, 1, 1], [], []>} : vector<8x64xf32>, vector<64x256xf32>, vector<8x256xf32> -> vector<8x256xf32>
    %296 = arith.addf %294, %295 : vector<8x256xf32>
    %297 = arith.negf %296 : vector<8x256xf32>
    %298 = math.exp %297 : vector<8x256xf32>
    %cst_38 = arith.constant 1.000000e+00 : f32
    %299 = vector.broadcast %cst_38 : f32 to vector<8x256xf32>
    %300 = arith.addf %299, %298 : vector<8x256xf32>
    %301 = arith.divf %299, %300 : vector<8x256xf32>
    %302 = math.tanh %296 : vector<8x256xf32>
    %303 = vector.extract_strided_slice %301 {offsets = [0, 64], sizes = [8, 64], strides = [1, 1]} : vector<8x256xf32> to vector<8x64xf32>
    %304 = arith.mulf %303, %288 : vector<8x64xf32>
    %305 = vector.extract_strided_slice %301 {offsets = [0, 0], sizes = [8, 64], strides = [1, 1]} : vector<8x256xf32> to vector<8x64xf32>
    %306 = vector.extract_strided_slice %302 {offsets = [0, 192], sizes = [8, 64], strides = [1, 1]} : vector<8x256xf32> to vector<8x64xf32>
    %307 = arith.mulf %305, %306 : vector<8x64xf32>
    %308 = arith.addf %304, %307 : vector<8x64xf32>
    %309 = vector.extract_strided_slice %301 {offsets = [0, 128], sizes = [8, 64], strides = [1, 1]} : vector<8x256xf32> to vector<8x64xf32>
    %310 = math.tanh %308 : vector<8x64xf32>
    %311 = arith.mulf %309, %310 : vector<8x64xf32>
    %312 = vector.shape_cast %23 : vector<1x256xi1> to vector<1x256xi1>
    %313 = vector.broadcast %312 : vector<1x256xi1> to vector<8x256xi1>
    %314 = arith.select %313, %245, %246 : vector<8x256xi1>, vector<8x256xf32>
    %cst_39 = arith.constant dense<0.000000e+00> : vector<8x256xf32>
    %315 = tpu.matmul %311, %237, %cst_39 {dimension_numbers = #tpu.dot_dimension_numbers<[1], [0], [0], [1], [0, 0, 1, 1], [], []>} : vector<8x64xf32>, vector<64x256xf32>, vector<8x256xf32> -> vector<8x256xf32>
    %316 = arith.addf %314, %315 : vector<8x256xf32>
    %317 = arith.negf %316 : vector<8x256xf32>
    %318 = math.exp %317 : vector<8x256xf32>
    %cst_40 = arith.constant 1.000000e+00 : f32
    %319 = vector.broadcast %cst_40 : f32 to vector<8x256xf32>
    %320 = arith.addf %319, %318 : vector<8x256xf32>
    %321 = arith.divf %319, %320 : vector<8x256xf32>
    %322 = math.tanh %316 : vector<8x256xf32>
    %323 = vector.extract_strided_slice %321 {offsets = [0, 64], sizes = [8, 64], strides = [1, 1]} : vector<8x256xf32> to vector<8x64xf32>
    %324 = arith.mulf %323, %308 : vector<8x64xf32>
    %325 = vector.extract_strided_slice %321 {offsets = [0, 0], sizes = [8, 64], strides = [1, 1]} : vector<8x256xf32> to vector<8x64xf32>
    %326 = vector.extract_strided_slice %322 {offsets = [0, 192], sizes = [8, 64], strides = [1, 1]} : vector<8x256xf32> to vector<8x64xf32>
    %327 = arith.mulf %325, %326 : vector<8x64xf32>
    %328 = arith.addf %324, %327 : vector<8x64xf32>
    %329 = vector.extract_strided_slice %321 {offsets = [0, 128], sizes = [8, 64], strides = [1, 1]} : vector<8x256xf32> to vector<8x64xf32>
    %330 = math.tanh %328 : vector<8x64xf32>
    %331 = arith.mulf %329, %330 : vector<8x64xf32>
    %332 = vector.shape_cast %23 : vector<1x256xi1> to vector<1x256xi1>
    %333 = vector.broadcast %332 : vector<1x256xi1> to vector<8x256xi1>
    %334 = arith.select %333, %246, %245 : vector<8x256xi1>, vector<8x256xf32>
    %cst_41 = arith.constant dense<0.000000e+00> : vector<8x256xf32>
    %335 = tpu.matmul %331, %237, %cst_41 {dimension_numbers = #tpu.dot_dimension_numbers<[1], [0], [0], [1], [0, 0, 1, 1], [], []>} : vector<8x64xf32>, vector<64x256xf32>, vector<8x256xf32> -> vector<8x256xf32>
    %336 = arith.addf %334, %335 : vector<8x256xf32>
    %337 = arith.negf %336 : vector<8x256xf32>
    %338 = math.exp %337 : vector<8x256xf32>
    %cst_42 = arith.constant 1.000000e+00 : f32
    %339 = vector.broadcast %cst_42 : f32 to vector<8x256xf32>
    %340 = arith.addf %339, %338 : vector<8x256xf32>
    %341 = arith.divf %339, %340 : vector<8x256xf32>
    %342 = math.tanh %336 : vector<8x256xf32>
    %343 = vector.extract_strided_slice %341 {offsets = [0, 64], sizes = [8, 64], strides = [1, 1]} : vector<8x256xf32> to vector<8x64xf32>
    %344 = arith.mulf %343, %328 : vector<8x64xf32>
    %345 = vector.extract_strided_slice %341 {offsets = [0, 0], sizes = [8, 64], strides = [1, 1]} : vector<8x256xf32> to vector<8x64xf32>
    %346 = vector.extract_strided_slice %342 {offsets = [0, 192], sizes = [8, 64], strides = [1, 1]} : vector<8x256xf32> to vector<8x64xf32>
    %347 = arith.mulf %345, %346 : vector<8x64xf32>
    %348 = arith.addf %344, %347 : vector<8x64xf32>
    %349 = vector.extract_strided_slice %341 {offsets = [0, 128], sizes = [8, 64], strides = [1, 1]} : vector<8x256xf32> to vector<8x64xf32>
    %350 = math.tanh %348 : vector<8x64xf32>
    %351 = arith.mulf %349, %350 : vector<8x64xf32>
    %352 = vector.shape_cast %23 : vector<1x256xi1> to vector<1x256xi1>
    %353 = vector.broadcast %352 : vector<1x256xi1> to vector<8x256xi1>
    %354 = arith.select %353, %247, %244 : vector<8x256xi1>, vector<8x256xf32>
    %cst_43 = arith.constant dense<0.000000e+00> : vector<8x256xf32>
    %355 = tpu.matmul %351, %237, %cst_43 {dimension_numbers = #tpu.dot_dimension_numbers<[1], [0], [0], [1], [0, 0, 1, 1], [], []>} : vector<8x64xf32>, vector<64x256xf32>, vector<8x256xf32> -> vector<8x256xf32>
    %356 = arith.addf %354, %355 : vector<8x256xf32>
    %357 = arith.negf %356 : vector<8x256xf32>
    %358 = math.exp %357 : vector<8x256xf32>
    %cst_44 = arith.constant 1.000000e+00 : f32
    %359 = vector.broadcast %cst_44 : f32 to vector<8x256xf32>
    %360 = arith.addf %359, %358 : vector<8x256xf32>
    %361 = arith.divf %359, %360 : vector<8x256xf32>
    %362 = math.tanh %356 : vector<8x256xf32>
    %363 = vector.extract_strided_slice %361 {offsets = [0, 64], sizes = [8, 64], strides = [1, 1]} : vector<8x256xf32> to vector<8x64xf32>
    %364 = arith.mulf %363, %348 : vector<8x64xf32>
    %365 = vector.extract_strided_slice %361 {offsets = [0, 0], sizes = [8, 64], strides = [1, 1]} : vector<8x256xf32> to vector<8x64xf32>
    %366 = vector.extract_strided_slice %362 {offsets = [0, 192], sizes = [8, 64], strides = [1, 1]} : vector<8x256xf32> to vector<8x64xf32>
    %367 = arith.mulf %365, %366 : vector<8x64xf32>
    %368 = arith.addf %364, %367 : vector<8x64xf32>
    %369 = vector.extract_strided_slice %361 {offsets = [0, 128], sizes = [8, 64], strides = [1, 1]} : vector<8x256xf32> to vector<8x64xf32>
    %370 = math.tanh %368 : vector<8x64xf32>
    %371 = arith.mulf %369, %370 : vector<8x64xf32>
    %372 = vector.shape_cast %23 : vector<1x256xi1> to vector<1x256xi1>
    %373 = vector.broadcast %372 : vector<1x256xi1> to vector<8x256xi1>
    %374 = arith.select %373, %248, %243 : vector<8x256xi1>, vector<8x256xf32>
    %cst_45 = arith.constant dense<0.000000e+00> : vector<8x256xf32>
    %375 = tpu.matmul %371, %237, %cst_45 {dimension_numbers = #tpu.dot_dimension_numbers<[1], [0], [0], [1], [0, 0, 1, 1], [], []>} : vector<8x64xf32>, vector<64x256xf32>, vector<8x256xf32> -> vector<8x256xf32>
    %376 = arith.addf %374, %375 : vector<8x256xf32>
    %377 = arith.negf %376 : vector<8x256xf32>
    %378 = math.exp %377 : vector<8x256xf32>
    %cst_46 = arith.constant 1.000000e+00 : f32
    %379 = vector.broadcast %cst_46 : f32 to vector<8x256xf32>
    %380 = arith.addf %379, %378 : vector<8x256xf32>
    %381 = arith.divf %379, %380 : vector<8x256xf32>
    %382 = math.tanh %376 : vector<8x256xf32>
    %383 = vector.extract_strided_slice %381 {offsets = [0, 64], sizes = [8, 64], strides = [1, 1]} : vector<8x256xf32> to vector<8x64xf32>
    %384 = arith.mulf %383, %368 : vector<8x64xf32>
    %385 = vector.extract_strided_slice %381 {offsets = [0, 0], sizes = [8, 64], strides = [1, 1]} : vector<8x256xf32> to vector<8x64xf32>
    %386 = vector.extract_strided_slice %382 {offsets = [0, 192], sizes = [8, 64], strides = [1, 1]} : vector<8x256xf32> to vector<8x64xf32>
    %387 = arith.mulf %385, %386 : vector<8x64xf32>
    %388 = arith.addf %384, %387 : vector<8x64xf32>
    %389 = vector.extract_strided_slice %381 {offsets = [0, 128], sizes = [8, 64], strides = [1, 1]} : vector<8x256xf32> to vector<8x64xf32>
    %390 = math.tanh %388 : vector<8x64xf32>
    %391 = arith.mulf %389, %390 : vector<8x64xf32>
    %392 = vector.shape_cast %23 : vector<1x256xi1> to vector<1x256xi1>
    %393 = vector.broadcast %392 : vector<1x256xi1> to vector<8x256xi1>
    %394 = arith.select %393, %249, %242 : vector<8x256xi1>, vector<8x256xf32>
    %cst_47 = arith.constant dense<0.000000e+00> : vector<8x256xf32>
    %395 = tpu.matmul %391, %237, %cst_47 {dimension_numbers = #tpu.dot_dimension_numbers<[1], [0], [0], [1], [0, 0, 1, 1], [], []>} : vector<8x64xf32>, vector<64x256xf32>, vector<8x256xf32> -> vector<8x256xf32>
    %396 = arith.addf %394, %395 : vector<8x256xf32>
    %397 = arith.negf %396 : vector<8x256xf32>
    %398 = math.exp %397 : vector<8x256xf32>
    %cst_48 = arith.constant 1.000000e+00 : f32
    %399 = vector.broadcast %cst_48 : f32 to vector<8x256xf32>
    %400 = arith.addf %399, %398 : vector<8x256xf32>
    %401 = arith.divf %399, %400 : vector<8x256xf32>
    %402 = math.tanh %396 : vector<8x256xf32>
    %403 = vector.extract_strided_slice %401 {offsets = [0, 64], sizes = [8, 64], strides = [1, 1]} : vector<8x256xf32> to vector<8x64xf32>
    %404 = arith.mulf %403, %388 : vector<8x64xf32>
    %405 = vector.extract_strided_slice %401 {offsets = [0, 0], sizes = [8, 64], strides = [1, 1]} : vector<8x256xf32> to vector<8x64xf32>
    %406 = vector.extract_strided_slice %402 {offsets = [0, 192], sizes = [8, 64], strides = [1, 1]} : vector<8x256xf32> to vector<8x64xf32>
    %407 = arith.mulf %405, %406 : vector<8x64xf32>
    %408 = arith.addf %404, %407 : vector<8x64xf32>
    %409 = vector.extract_strided_slice %401 {offsets = [0, 128], sizes = [8, 64], strides = [1, 1]} : vector<8x256xf32> to vector<8x64xf32>
    %410 = math.tanh %408 : vector<8x64xf32>
    %411 = arith.mulf %409, %410 : vector<8x64xf32>
    %c240 = arith.constant 240 : index
    %c0_49 = arith.constant 0 : index
    %412 = vector.load %arg2[%c240, %c0_49] : memref<312x256xf32, #tpu.memory_space<vmem>>, vector<64x256xf32>
    %c304 = arith.constant 304 : index
    %c0_50 = arith.constant 0 : index
    %413 = vector.load %arg2[%c304, %c0_50] : memref<312x256xf32, #tpu.memory_space<vmem>>, vector<1x256xf32>
    %cst_51 = arith.constant dense<0.000000e+00> : vector<8x256xf32>
    %414 = tpu.matmul %411, %412, %cst_51 {dimension_numbers = #tpu.dot_dimension_numbers<[1], [0], [0], [1], [0, 0, 1, 1], [], []>} : vector<8x64xf32>, vector<64x256xf32>, vector<8x256xf32> -> vector<8x256xf32>
    %415 = vector.extract_strided_slice %414 {offsets = [0, 0], sizes = [8, 8], strides = [1, 1]} : vector<8x256xf32> to vector<8x8xf32>
    %416 = vector.extract_strided_slice %413 {offsets = [0, 0], sizes = [1, 8], strides = [1, 1]} : vector<1x256xf32> to vector<1x8xf32>
    %417 = vector.broadcast %416 : vector<1x8xf32> to vector<8x8xf32>
    %418 = arith.addf %415, %417 : vector<8x8xf32>
    %c0_52 = arith.constant 0 : index
    %c0_53 = arith.constant 0 : index
    %419 = vector.load %arg3[%c0_52, %c0_53] : memref<8x8xf32, #tpu.memory_space<vmem>>, vector<8x8xf32>
    tpu.vector_store %arg3[%c0_52, %c0_53], %418 {strides = array<i32>} : memref<8x8xf32, #tpu.memory_space<vmem>>, vector<8x8xf32>,
    return
  }
}

</mosaic_0001>

<llo_original>
// kernel: forward.1
$region0: #{forward.1}
  #allocation0 [shape = 'u32[]', space=smem, size = 0x4, offset = 0x4, fixed_abs, tag = 'smem constant byte address 0x4 - core index']
  #allocation1 [shape = 'u32[144,128]{1,0:T(1,128)}', space=vmem, size = 0x12000, scoped, tag = 'internal scratch']
  %s0 = inlined_call_operand.vmem [shape: s32[64,1], index: 0, kind: input, shape index: {}]
  %s1 = inlined_call_operand.vmem [shape: f32[56,32], index: 1, kind: input, shape index: {}]
  %s2 = inlined_call_operand.hbm [shape: f32[312,256], index: 2, kind: input, shape index: {}]
  %s3 = inlined_call_operand.vmem [shape: f32[8,8], index: 3, kind: output, shape index: {}]
  %s4 = sld [smem:[#allocation0]]
  $region26: #{forward.1} parent=0
    _
  %s6 = ssub.s32 1, %s4
  %s7 = scalar_select 0, %s6, %s4
  $region1: #{forward.1} parent=0
    #allocation2 [shape = 'u8[319488]{0}', space=vmem, size = 0x4e000, scoped, tag = 'input window, operand 2, single buffered']
    #allocation3 [shape = 's32[1]{0}', space=sflag, size = 0x4, scoped, tag = 'scoped memory for forward.1']
    %8 = vsyncpa [#allocation3], 0
    // Predicated region
    $region2: #{forward.1} parent=1 // pred_check
      _
    $region3: #{forward.1} parent=1 // pred_check_branch
      %10 = sbr.rel (0) target = $region5
    $region4: #{forward.1} parent=1 // pred_region
      _
    $region5: #{forward.1} parent=1 // pred_fallthru
      _
    // Predicated region
    $region6: #{forward.1} parent=1 // pred_check
      _
    $region7: #{forward.1} parent=1 // pred_check_branch
      %12 = sbr.rel (0) target = $region9
    $region8: #{forward.1} parent=1 // pred_region
      _
    $region9: #{forward.1} parent=1 // pred_fallthru
      _
    // Predicated region
    $region10: #{forward.1} parent=1 // pred_check
      _
    $region11: #{forward.1} parent=1 // pred_check_branch
      %14 = sbr.rel (0) target = $region13
    $region12: #{forward.1} parent=1 // pred_region
      %s16 = ssub.s32 9984, 9984
      %17 = vsyncadd [#allocation3], %s16
      %s18 = sshll.u32 [#allocation2], 4
      %s19 = int_to_ptr.vmem [resolvable:$true] %s18
      %24 = dma.hbm_to_vmem [thread:$0]  %s2, 9984, %s19, [#allocation3], 256, 256, 16
    $region13: #{forward.1} parent=1 // pred_fallthru
      _
    // Predicated region
    $region14: #{forward.1} parent=1 // pred_check
      _
    $region15: #{forward.1} parent=1 // pred_check_branch
      %26 = sbr.rel (0) target = $region17
    $region16: #{forward.1} parent=1 // pred_region
      %27 = dma.done [#allocation3], 9984
    $region17: #{forward.1} parent=1 // pred_fallthru
      _
    %v28 = vlaneseq
    %v29 = vand.u32 %v28, 127
    %v30 = vadd.s32 %v29, 128
    %vm31 = vcmp.ge.s32.totalorder %v29, 0
    %vm32 = vcmp.ge.s32.totalorder %v30, 0
    %vm33 = vcmp.lt.s32.totalorder %v29, 32
    %vm34 = vcmp.lt.s32.totalorder %v30, 32
    %vm35 = vmand %vm31, %vm33
    %vm36 = vmand %vm32, %vm34
    %vm37 = vcmp.ge.s32.totalorder %v29, 64
    %vm38 = vcmp.ge.s32.totalorder %v30, 64
    %vm39 = vcmp.lt.s32.totalorder %v29, 96
    %vm40 = vcmp.lt.s32.totalorder %v30, 96
    %vm41 = vmand %vm37, %vm39
    %vm42 = vmand %vm38, %vm40
    %vm43 = vmor %vm35, %vm41
    %vm44 = vmor %vm36, %vm42
    %vm45 = vcmp.ge.s32.totalorder %v29, 128
    %vm46 = vcmp.ge.s32.totalorder %v30, 128
    %vm47 = vcmp.lt.s32.totalorder %v29, 160
    %vm48 = vcmp.lt.s32.totalorder %v30, 160
    %vm49 = vmand %vm45, %vm47
    %vm50 = vmand %vm46, %vm48
    %vm51 = vmor %vm43, %vm49
    %vm52 = vmor %vm44, %vm50
    %vm53 = vcmp.ge.s32.totalorder %v29, 192
    %vm54 = vcmp.ge.s32.totalorder %v30, 192
    %vm55 = vcmp.lt.s32.totalorder %v29, 224
    %vm56 = vcmp.lt.s32.totalorder %v30, 224
    %vm57 = vmand %vm53, %vm55
    %vm58 = vmand %vm54, %vm56
    %vm59 = vmor %vm51, %vm57
    %vm60 = vmor %vm52, %vm58
    %v61 = vld [vmem:[%s0] sm:$0xff]
    %v62 = vld [vmem:[%s0 + $0x8] sm:$0xff]
    %v63 = vld [vmem:[%s0 + $0x10] sm:$0xff]
    %v64 = vld [vmem:[%s0 + $0x18] sm:$0xff]
    %v65 = vld [vmem:[%s0 + $0x20] sm:$0xff]
    %v66 = vld [vmem:[%s0 + $0x28] sm:$0xff]
    %v67 = vld [vmem:[%s0 + $0x30] sm:$0xff]
    %v68 = vld [vmem:[%s0 + $0x38] sm:$0xff]
    %69 = vset.pattern.permute.xlu0 0
    %70 = vperm.xlu0 %69, %v61
    %v71 = vpop.permute.xlu0 %70
    %72 = vset.pattern.permute.xlu0 0
    %73 = vperm.xlu0 %72, %v62
    %v74 = vpop.permute.xlu0 %73
    %75 = vset.pattern.permute.xlu0 0
    %76 = vperm.xlu0 %75, %v63
    %v77 = vpop.permute.xlu0 %76
    %78 = vset.pattern.permute.xlu0 0
    %79 = vperm.xlu0 %78, %v64
    %v80 = vpop.permute.xlu0 %79
    %81 = vset.pattern.permute.xlu0 0
    %82 = vperm.xlu0 %81, %v65
    %v83 = vpop.permute.xlu0 %82
    %84 = vset.pattern.permute.xlu0 0
    %85 = vperm.xlu0 %84, %v66
    %v86 = vpop.permute.xlu0 %85
    %87 = vset.pattern.permute.xlu0 0
    %88 = vperm.xlu0 %87, %v67
    %v89 = vpop.permute.xlu0 %88
    %90 = vset.pattern.permute.xlu0 0
    %91 = vperm.xlu0 %90, %v68
    %v92 = vpop.permute.xlu0 %91
    %vm93 = vcmp.eq.s32.totalorder %v29, %v71
    %vm94 = vcmp.eq.s32.totalorder %v29, %v74
    %vm95 = vcmp.eq.s32.totalorder %v29, %v77
    %vm96 = vcmp.eq.s32.totalorder %v29, %v80
    %vm97 = vcmp.eq.s32.totalorder %v29, %v83
    %vm98 = vcmp.eq.s32.totalorder %v29, %v86
    %vm99 = vcmp.eq.s32.totalorder %v29, %v89
    %vm100 = vcmp.eq.s32.totalorder %v29, %v92
    %v101 = vsel %vm93, 1, 0
    %v102 = vsel %vm94, 1, 0
    %v103 = vsel %vm95, 1, 0
    %v104 = vsel %vm96, 1, 0
    %v105 = vsel %vm97, 1, 0
    %v106 = vsel %vm98, 1, 0
    %v107 = vsel %vm99, 1, 0
    %v108 = vsel %vm100, 1, 0
    %v109 = vcvt.s32.f32 %v101
    %v110 = vcvt.s32.f32 %v102
    %v111 = vcvt.s32.f32 %v103
    %v112 = vcvt.s32.f32 %v104
    %v113 = vcvt.s32.f32 %v105
    %v114 = vcvt.s32.f32 %v106
    %v115 = vcvt.s32.f32 %v107
    %v116 = vcvt.s32.f32 %v108
    %v117 = vld [vmem:[%s1] sm:$0xff]
    %v118 = vld [vmem:[%s1 + $0x8] sm:$0xff]
    %v119 = vld [vmem:[%s1 + $0x10] sm:$0xff]
    %v120 = vld [vmem:[%s1 + $0x18] sm:$0xff]
    %v121 = vld [vmem:[%s1 + $0x20] sm:$0xff]
    %v122 = vld [vmem:[%s1 + $0x28] sm:$0xff]
    %v123 = vld [vmem:[%s1 + $0x30] sm:$0xff]
    %vm124 = vcmask 457728
    %v126 = vsel %vm124, %v109, 0
    %v129 = vsel %vm124, %v110, 0
    %v132 = vsel %vm124, %v111, 0
    %v135 = vsel %vm124, %v112, 0
    %v138 = vsel %vm124, %v113, 0
    %v141 = vsel %vm124, %v114, 0
    %v144 = vsel %vm124, %v115, 0
    %v147 = vsel %vm124, %v116, 0
    %149 = vmatprep.subr.mxu0 0.0
    %150 = vmatpush1.msra.mxu0 %v117
    %151 = vmatprep.subr.mxu0 0.0
    %152 = vmatpush1.msra.mxu0 %v118
    %153 = vmatprep.subr.mxu0 0.0
    %154 = vmatpush1.msra.mxu0 %v119
    %155 = vmatprep.subr.mxu0 0.0
    %156 = vmatpush1.msra.mxu0 %v120
    %157 = vmatprep.subr.mxu0 0.0
    %158 = vmatpush1.msra.mxu0 %v121
    %159 = vmatprep.subr.mxu0 0.0
    %160 = vmatpush1.msra.mxu0 %v122
    %161 = vmatprep.subr.mxu0 0.0
    %162 = vmatpush1.msra.mxu0 %v123
    %163 = vmatprep.subr.mxu0 0.0
    %164 = vmatpush1.msra.mxu0 0.0
    %165 = vmatprep.subr.mxu0 0.0
    %166 = vmatpush1.msra.mxu0 0.0
    %167 = vmatprep.subr.mxu0 0.0
    %168 = vmatpush1.msra.mxu0 0.0
    %169 = vmatprep.subr.mxu0 0.0
    %170 = vmatpush1.msra.mxu0 0.0
    %171 = vmatprep.subr.mxu0 0.0
    %172 = vmatpush1.msra.mxu0 0.0
    %173 = vmatprep.subr.mxu0 0.0
    %174 = vmatpush1.msra.mxu0 0.0
    %175 = vmatprep.subr.mxu0 0.0
    %176 = vmatpush1.msra.mxu0 0.0
    %177 = vmatprep.subr.mxu0 0.0
    %178 = vmatpush1.msra.mxu0 0.0
    %179 = vmatprep.subr.mxu0 0.0
    %180 = vmatpush1.msra.mxu0 0.0
    %181 = vmatprep.subr.mxu0 0.0
    %182 = vmatpush1.msra.mxu0 0.0
    %183 = vmatprep.subr.mxu0 0.0
    %184 = vmatpush1.msra.mxu0 0.0
    %185 = vmatprep.subr.mxu0 0.0
    %186 = vmatpush1.msra.mxu0 0.0
    %187 = vmatprep.subr.mxu0 0.0
    %188 = vmatpush1.msra.mxu0 0.0
    %189 = vmatprep.subr.mxu0 0.0
    %190 = vmatpush1.msra.mxu0 0.0
    %191 = vmatprep.subr.mxu0 0.0
    %192 = vmatpush1.msra.mxu0 0.0
    %193 = vmatprep.subr.mxu0 0.0
    %194 = vmatpush1.msra.mxu0 0.0
    %195 = vmatprep.subr.mxu0 0.0
    %196 = vmatpush1.msra.mxu0 0.0
    %197 = vmatprep.subr.mxu0 0.0
    %198 = vmatpush1.msra.mxu0 0.0
    %199 = vmatprep.subr.mxu0 0.0
    %200 = vmatpush1.msra.mxu0 0.0
    %201 = vmatprep.subr.mxu0 0.0
    %202 = vmatpush1.msra.mxu0 0.0
    %203 = vmatprep.subr.mxu0 0.0
    %204 = vmatpush1.msra.mxu0 0.0
    %205 = vmatprep.subr.mxu0 0.0
    %206 = vmatpush1.msra.mxu0 0.0
    %207 = vmatprep.subr.mxu0 0.0
    %208 = vmatpush1.msra.mxu0 0.0
    %209 = vmatprep.subr.mxu0 0.0
    %210 = vmatpush1.msra.mxu0 0.0
    %211 = vmatprep.subr.mxu0 0.0
    %212 = vmatpush1.msra.mxu0 0.0
    %213 = vmatprep.mubr.f32.mxu0 0.0
    %214 = vmatmul.mubr.f32.gmra.mrb[0].mxu0 %v126
    %v215 = vpop.f32.mrb[0].mxu0
    %v216 = vadd.f32 0.0, %v215
    %v217 = vpop.f32.mrb[0].mxu0
    %218 = vmatprep.mubr.f32.mxu0 0.0
    %219 = vmatmul.mubr.f32.gmra.mrb[0].mxu0 %v129
    %v220 = vpop.f32.mrb[0].mxu0
    %v221 = vadd.f32 0.0, %v220
    %v222 = vpop.f32.mrb[0].mxu0
    %223 = vmatprep.mubr.f32.mxu0 0.0
    %224 = vmatmul.mubr.f32.gmra.mrb[0].mxu0 %v132
    %v225 = vpop.f32.mrb[0].mxu0
    %v226 = vadd.f32 0.0, %v225
    %v227 = vpop.f32.mrb[0].mxu0
    %228 = vmatprep.mubr.f32.mxu0 0.0
    %229 = vmatmul.mubr.f32.gmra.mrb[0].mxu0 %v135
    %v230 = vpop.f32.mrb[0].mxu0
    %v231 = vadd.f32 0.0, %v230
    %v232 = vpop.f32.mrb[0].mxu0
    %233 = vmatprep.mubr.f32.mxu0 0.0
    %234 = vmatmul.mubr.f32.gmra.mrb[0].mxu0 %v138
    %v235 = vpop.f32.mrb[0].mxu0
    %v236 = vadd.f32 0.0, %v235
    %v237 = vpop.f32.mrb[0].mxu0
    %238 = vmatprep.mubr.f32.mxu0 0.0
    %239 = vmatmul.mubr.f32.gmra.mrb[0].mxu0 %v141
    %v240 = vpop.f32.mrb[0].mxu0
    %v241 = vadd.f32 0.0, %v240
    %v242 = vpop.f32.mrb[0].mxu0
    %243 = vmatprep.mubr.f32.mxu0 0.0
    %244 = vmatmul.mubr.f32.gmra.mrb[0].mxu0 %v144
    %v245 = vpop.f32.mrb[0].mxu0
    %v246 = vadd.f32 0.0, %v245
    %v247 = vpop.f32.mrb[0].mxu0
    %248 = vmatprep.mubr.f32.mxu0 0.0
    %249 = vmatmul.mubr.f32.gmra.mrb[0].mxu0 %v147
    %v250 = vpop.f32.mrb[0].mxu0
    %v251 = vadd.f32 0.0, %v250
    %v252 = vpop.f32.mrb[0].mxu0
    %253 = vdwg.mxu0
    %v254 = vld [vmem:[#allocation2] sm:$0xff]
    %v255 = vld [vmem:[#allocation2 + $0x8] sm:$0xff]
    %v256 = vld [vmem:[#allocation2 + $0x10] sm:$0xff]
    %v257 = vld [vmem:[#allocation2 + $0x18] sm:$0xff]
    %v258 = vld [vmem:[#allocation2 + $0x20] sm:$0xff]
    %v259 = vld [vmem:[#allocation2 + $0x28] sm:$0xff]
    %v260 = vld [vmem:[#allocation2 + $0x30] sm:$0xff]
    %v261 = vld [vmem:[#allocation2 + $0x38] sm:$0xff]
    %v262 = vld [vmem:[#allocation2 + $0x40] sm:$0xff]
    %v263 = vld [vmem:[#allocation2 + $0x48] sm:$0xff]
    %v264 = vld [vmem:[#allocation2 + $0x50] sm:$0xff]
    %v265 = vld [vmem:[#allocation2 + $0x58] sm:$0xff]
    %v266 = vld [vmem:[#allocation2 + $0x60] sm:$0xff]
    %v267 = vld [vmem:[#allocation2 + $0x68] sm:$0xff]
    %v268 = vld [vmem:[#allocation2 + $0x70] sm:$0xff]
    %v269 = vld [vmem:[#allocation2 + $0x78] sm:$0xff]
    %v270 = vld [vmem:[#allocation2 + $0x80] sm:$0xff]
    %v271 = vld [vmem:[#allocation2 + $0x88] sm:$0xff]
    %v272 = vld [vmem:[#allocation2 + $0x90] sm:$0xff]
    %v273 = vld [vmem:[#allocation2 + $0x98] sm:$0xff]
    %v274 = vld [vmem:[#allocation2 + $0xa0] sm:$0xff]
    %v275 = vld [vmem:[#allocation2 + $0xa8] sm:$0xff]
    %v276 = vld [vmem:[#allocation2 + $0xb0] sm:$0xff]
    %v277 = vld [vmem:[#allocation2 + $0xb8] sm:$0xff]
    %s278 = scalar_lea.vmem [#allocation2], 192
    %v279 = vld [vmem:[%s278] ss:$8 sm:$0x3]
    %v281 = vlaneseq
    %v282 = vshrl.u32 %v281, 7
    %v283 = vsub.s32 0, %v282
    %v284 = vrot.slane %v279, %v283
    %v285 = vlaneseq
    %v286 = vshrl.u32 %v285, 7
    %v287 = vsub.s32 1, %v286
    %v288 = vrot.slane %v279, %v287
    %vm291 = vcmask 261120
    %v293 = vsel %vm291, %v216, 0
    %v296 = vsel %vm291, %v221, 0
    %v299 = vsel %vm291, %v226, 0
    %v302 = vsel %vm291, %v231, 0
    %v305 = vsel %vm291, %v236, 0
    %v308 = vsel %vm291, %v241, 0
    %v311 = vsel %vm291, %v246, 0
    %v314 = vsel %vm291, %v251, 0
    %316 = vmatprep.subr.mxu0 %v255
    %317 = vmatpush1.msra.mxu0 %v254
    %318 = vmatprep.subr.mxu0 %v257
    %319 = vmatpush1.msra.mxu0 %v256
    %320 = vmatprep.subr.mxu0 %v259
    %321 = vmatpush1.msra.mxu0 %v258
    %322 = vmatprep.subr.mxu0 %v261
    %323 = vmatpush1.msra.mxu0 %v260
    %324 = vmatprep.subr.mxu0 0.0
    %325 = vmatpush1.msra.mxu0 0.0
    %326 = vmatprep.subr.mxu0 0.0
    %327 = vmatpush1.msra.mxu0 0.0
    %328 = vmatprep.subr.mxu0 0.0
    %329 = vmatpush1.msra.mxu0 0.0
    %330 = vmatprep.subr.mxu0 0.0
    %331 = vmatpush1.msra.mxu0 0.0
    %332 = vmatprep.subr.mxu0 0.0
    %333 = vmatpush1.msra.mxu0 0.0
    %334 = vmatprep.subr.mxu0 0.0
    %335 = vmatpush1.msra.mxu0 0.0
    %336 = vmatprep.subr.mxu0 0.0
    %337 = vmatpush1.msra.mxu0 0.0
    %338 = vmatprep.subr.mxu0 0.0
    %339 = vmatpush1.msra.mxu0 0.0
    %340 = vmatprep.subr.mxu0 0.0
    %341 = vmatpush1.msra.mxu0 0.0
    %342 = vmatprep.subr.mxu0 0.0
    %343 = vmatpush1.msra.mxu0 0.0
    %344 = vmatprep.subr.mxu0 0.0
    %345 = vmatpush1.msra.mxu0 0.0
    %346 = vmatprep.subr.mxu0 0.0
    %347 = vmatpush1.msra.mxu0 0.0
    %348 = vmatprep.subr.mxu0 0.0
    %349 = vmatpush1.msra.mxu0 0.0
    %350 = vmatprep.subr.mxu0 0.0
    %351 = vmatpush1.msra.mxu0 0.0
    %352 = vmatprep.subr.mxu0 0.0
    %353 = vmatpush1.msra.mxu0 0.0
    %354 = vmatprep.subr.mxu0 0.0
    %355 = vmatpush1.msra.mxu0 0.0
    %356 = vmatprep.subr.mxu0 0.0
    %357 = vmatpush1.msra.mxu0 0.0
    %358 = vmatprep.subr.mxu0 0.0
    %359 = vmatpush1.msra.mxu0 0.0
    %360 = vmatprep.subr.mxu0 0.0
    %361 = vmatpush1.msra.mxu0 0.0
    %362 = vmatprep.subr.mxu0 0.0
    %363 = vmatpush1.msra.mxu0 0.0
    %364 = vmatprep.subr.mxu0 0.0
    %365 = vmatpush1.msra.mxu0 0.0
    %366 = vmatprep.subr.mxu0 0.0
    %367 = vmatpush1.msra.mxu0 0.0
    %368 = vmatprep.subr.mxu0 0.0
    %369 = vmatpush1.msra.mxu0 0.0
    %370 = vmatprep.subr.mxu0 0.0
    %371 = vmatpush1.msra.mxu0 0.0
    %372 = vmatprep.subr.mxu0 0.0
    %373 = vmatpush1.msra.mxu0 0.0
    %374 = vmatprep.subr.mxu0 0.0
    %375 = vmatpush1.msra.mxu0 0.0
    %376 = vmatprep.subr.mxu0 0.0
    %377 = vmatpush1.msra.mxu0 0.0
    %378 = vmatprep.subr.mxu0 0.0
    %379 = vmatpush1.msra.mxu0 0.0
    %380 = vmatprep.mubr.f32.mxu0 0.0
    %381 = vmatmul.mubr.f32.gmra.mrb[0].mxu0 %v293
    %v382 = vpop.f32.mrb[0].mxu0
    %v383 = vadd.f32 %v284, %v382
    %v384 = vpop.f32.mrb[0].mxu0
    %v385 = vadd.f32 %v288, %v384
    %386 = vmatprep.mubr.f32.mxu0 0.0
    %387 = vmatmul.mubr.f32.gmra.mrb[0].mxu0 %v296
    %v388 = vpop.f32.mrb[0].mxu0
    %v389 = vadd.f32 %v284, %v388
    %v390 = vpop.f32.mrb[0].mxu0
    %v391 = vadd.f32 %v288, %v390
    %392 = vmatprep.mubr.f32.mxu0 0.0
    %393 = vmatmul.mubr.f32.gmra.mrb[0].mxu0 %v299
    %v394 = vpop.f32.mrb[0].mxu0
    %v395 = vadd.f32 %v284, %v394
    %v396 = vpop.f32.mrb[0].mxu0
    %v397 = vadd.f32 %v288, %v396
    %398 = vmatprep.mubr.f32.mxu0 0.0
    %399 = vmatmul.mubr.f32.gmra.mrb[0].mxu0 %v302
    %v400 = vpop.f32.mrb[0].mxu0
    %v401 = vadd.f32 %v284, %v400
    %v402 = vpop.f32.mrb[0].mxu0
    %v403 = vadd.f32 %v288, %v402
    %404 = vmatprep.mubr.f32.mxu0 0.0
    %405 = vmatmul.mubr.f32.gmra.mrb[0].mxu0 %v305
    %v406 = vpop.f32.mrb[0].mxu0
    %v407 = vadd.f32 %v284, %v406
    %v408 = vpop.f32.mrb[0].mxu0
    %v409 = vadd.f32 %v288, %v408
    %410 = vmatprep.mubr.f32.mxu0 0.0
    %411 = vmatmul.mubr.f32.gmra.mrb[0].mxu0 %v308
    %v412 = vpop.f32.mrb[0].mxu0
    %v413 = vadd.f32 %v284, %v412
    %v414 = vpop.f32.mrb[0].mxu0
    %v415 = vadd.f32 %v288, %v414
    %416 = vmatprep.mubr.f32.mxu0 0.0
    %417 = vmatmul.mubr.f32.gmra.mrb[0].mxu0 %v311
    %v418 = vpop.f32.mrb[0].mxu0
    %v419 = vadd.f32 %v284, %v418
    %v420 = vpop.f32.mrb[0].mxu0
    %v421 = vadd.f32 %v288, %v420
    %422 = vmatprep.mubr.f32.mxu0 0.0
    %423 = vmatmul.mubr.f32.gmra.mrb[0].mxu0 %v314
    %v424 = vpop.f32.mrb[0].mxu0
    %v425 = vadd.f32 %v284, %v424
    %v426 = vpop.f32.mrb[0].mxu0
    %v427 = vadd.f32 %v288, %v426
    %428 = vdwg.mxu0
    %v429 = vsel %vm59, 1, 0
    %v430 = vsel %vm60, 1, 0
    %vm431 = vcmp.eq.s32.totalorder %v429, 1
    %vm432 = vcmp.eq.s32.totalorder %v430, 1
    %v433 = vsel %vm431, %v383, %v425
    %v434 = vsel %vm432, %v385, %v427
    %vm435 = vcmask 523264
    %v437 = vsel %vm435, 0.0, 0
    %439 = vmatprep.subr.mxu0 %v263
    %440 = vmatpush1.msra.mxu0 %v262
    %441 = vmatprep.subr.mxu0 %v265
    %442 = vmatpush1.msra.mxu0 %v264
    %443 = vmatprep.subr.mxu0 %v267
    %444 = vmatpush1.msra.mxu0 %v266
    %445 = vmatprep.subr.mxu0 %v269
    %446 = vmatpush1.msra.mxu0 %v268
    %447 = vmatprep.subr.mxu0 %v271
    %448 = vmatpush1.msra.mxu0 %v270
    %449 = vmatprep.subr.mxu0 %v273
    %450 = vmatpush1.msra.mxu0 %v272
    %451 = vmatprep.subr.mxu0 %v275
    %452 = vmatpush1.msra.mxu0 %v274
    %453 = vmatprep.subr.mxu0 %v277
    %454 = vmatpush1.msra.mxu0 %v276
    %455 = vmatprep.subr.mxu0 0.0
    %456 = vmatpush1.msra.mxu0 0.0
    %457 = vmatprep.subr.mxu0 0.0
    %458 = vmatpush1.msra.mxu0 0.0
    %459 = vmatprep.subr.mxu0 0.0
    %460 = vmatpush1.msra.mxu0 0.0
    %461 = vmatprep.subr.mxu0 0.0
    %462 = vmatpush1.msra.mxu0 0.0
    %463 = vmatprep.subr.mxu0 0.0
    %464 = vmatpush1.msra.mxu0 0.0
    %465 = vmatprep.subr.mxu0 0.0
    %466 = vmatpush1.msra.mxu0 0.0
    %467 = vmatprep.subr.mxu0 0.0
    %468 = vmatpush1.msra.mxu0 0.0
    %469 = vmatprep.subr.mxu0 0.0
    %470 = vmatpush1.msra.mxu0 0.0
    %471 = vmatprep.subr.mxu0 0.0
    %472 = vmatpush1.msra.mxu0 0.0
    %473 = vmatprep.subr.mxu0 0.0
    %474 = vmatpush1.msra.mxu0 0.0
    %475 = vmatprep.subr.mxu0 0.0
    %476 = vmatpush1.msra.mxu0 0.0
    %477 = vmatprep.subr.mxu0 0.0
    %478 = vmatpush1.msra.mxu0 0.0
    %479 = vmatprep.subr.mxu0 0.0
    %480 = vmatpush1.msra.mxu0 0.0
    %481 = vmatprep.subr.mxu0 0.0
    %482 = vmatpush1.msra.mxu0 0.0
    %483 = vmatprep.subr.mxu0 0.0
    %484 = vmatpush1.msra.mxu0 0.0
    %485 = vmatprep.subr.mxu0 0.0
    %486 = vmatpush1.msra.mxu0 0.0
    %487 = vmatprep.subr.mxu0 0.0
    %488 = vmatpush1.msra.mxu0 0.0
    %489 = vmatprep.subr.mxu0 0.0
    %490 = vmatpush1.msra.mxu0 0.0
    %491 = vmatprep.subr.mxu0 0.0
    %492 = vmatpush1.msra.mxu0 0.0
    %493 = vmatprep.subr.mxu0 0.0
    %494 = vmatpush1.msra.mxu0 0.0
    %495 = vmatprep.subr.mxu0 0.0
    %496 = vmatpush1.msra.mxu0 0.0
    %497 = vmatprep.subr.mxu0 0.0
    %498 = vmatpush1.msra.mxu0 0.0
    %499 = vmatprep.subr.mxu0 0.0
    %500 = vmatpush1.msra.mxu0 0.0
    %501 = vmatprep.subr.mxu0 0.0
    %502 = vmatpush1.msra.mxu0 0.0
    %503 = vmatprep.mubr.f32.mxu0 0.0
    %504 = vmatmul.mubr.f32.gmra.mrb[0].mxu0 %v437
    %v505 = vpop.f32.mrb[0].mxu0
    %v506 = vadd.f32 0.0, %v505
    %v507 = vpop.f32.mrb[0].mxu0
    %v508 = vadd.f32 0.0, %v507
    %509 = vdwg.mxu0
    %v510 = vadd.f32 %v433, %v506
    %v511 = vadd.f32 %v434, %v508
    %v512 = vxor.u32 %v510, 2147483648
    %v513 = vxor.u32 %v511, 2147483648
    %v514 = vmul.f32 %v512, 1.442695
    %v515 = vpow.pop %v514
    %v516 = vmul.f32 %v513, 1.442695
    %v517 = vpow.pop %v516
    %v518 = vadd.f32 %v515, 1.0
    %v519 = vadd.f32 %v517, 1.0
    %v520 = vrcp.pop %v518
    %v521 = vmul.f32 1.0, %v520
    %v522 = vrcp.pop %v519
    %v523 = vmul.f32 1.0, %v522
    %v524 = vtanh.pop %v511
    %v525 = vmul.f32 %v521, 0.0
    %527 = vrot.lane.b32.xlu0 %v524, 64
    %v528 = vpop.permute.xlu0 %527
    %v530 = vmul.f32 %v521, %v528
    %532 = vrot.lane.b32.xlu0 %v530, 64
    %v533 = vpop.permute.xlu0 %532
    %v535 = vadd.f32 %v525, %v533
    %v536 = vtanh.pop %v535
    %538 = vrot.lane.b32.xlu0 %v536, 64
    %v539 = vpop.permute.xlu0 %538
    %v541 = vmul.f32 %v523, %v539
    %v542 = vsel %vm431, %v389, %v419
    %v543 = vsel %vm432, %v391, %v421
    %v545 = vsel %vm435, %v541, 0
    %547 = vmatprep.subr.mxu0 %v263
    %548 = vmatpush1.msra.mxu0 %v262
    %549 = vmatprep.subr.mxu0 %v265
    %550 = vmatpush1.msra.mxu0 %v264
    %551 = vmatprep.subr.mxu0 %v267
    %552 = vmatpush1.msra.mxu0 %v266
    %553 = vmatprep.subr.mxu0 %v269
    %554 = vmatpush1.msra.mxu0 %v268
    %555 = vmatprep.subr.mxu0 %v271
    %556 = vmatpush1.msra.mxu0 %v270
    %557 = vmatprep.subr.mxu0 %v273
    %558 = vmatpush1.msra.mxu0 %v272
    %559 = vmatprep.subr.mxu0 %v275
    %560 = vmatpush1.msra.mxu0 %v274
    %561 = vmatprep.subr.mxu0 %v277
    %562 = vmatpush1.msra.mxu0 %v276
    %563 = vmatprep.subr.mxu0 0.0
    %564 = vmatpush1.msra.mxu0 0.0
    %565 = vmatprep.subr.mxu0 0.0
    %566 = vmatpush1.msra.mxu0 0.0
    %567 = vmatprep.subr.mxu0 0.0
    %568 = vmatpush1.msra.mxu0 0.0
    %569 = vmatprep.subr.mxu0 0.0
    %570 = vmatpush1.msra.mxu0 0.0
    %571 = vmatprep.subr.mxu0 0.0
    %572 = vmatpush1.msra.mxu0 0.0
    %573 = vmatprep.subr.mxu0 0.0
    %574 = vmatpush1.msra.mxu0 0.0
    %575 = vmatprep.subr.mxu0 0.0
    %576 = vmatpush1.msra.mxu0 0.0
    %577 = vmatprep.subr.mxu0 0.0
    %578 = vmatpush1.msra.mxu0 0.0
    %579 = vmatprep.subr.mxu0 0.0
    %580 = vmatpush1.msra.mxu0 0.0
    %581 = vmatprep.subr.mxu0 0.0
    %582 = vmatpush1.msra.mxu0 0.0
    %583 = vmatprep.subr.mxu0 0.0
    %584 = vmatpush1.msra.mxu0 0.0
    %585 = vmatprep.subr.mxu0 0.0
    %586 = vmatpush1.msra.mxu0 0.0
    %587 = vmatprep.subr.mxu0 0.0
    %588 = vmatpush1.msra.mxu0 0.0
    %589 = vmatprep.subr.mxu0 0.0
    %590 = vmatpush1.msra.mxu0 0.0
    %591 = vmatprep.subr.mxu0 0.0
    %592 = vmatpush1.msra.mxu0 0.0
    %593 = vmatprep.subr.mxu0 0.0
    %594 = vmatpush1.msra.mxu0 0.0
    %595 = vmatprep.subr.mxu0 0.0
    %596 = vmatpush1.msra.mxu0 0.0
    %597 = vmatprep.subr.mxu0 0.0
    %598 = vmatpush1.msra.mxu0 0.0
    %599 = vmatprep.subr.mxu0 0.0
    %600 = vmatpush1.msra.mxu0 0.0
    %601 = vmatprep.subr.mxu0 0.0
    %602 = vmatpush1.msra.mxu0 0.0
    %603 = vmatprep.subr.mxu0 0.0
    %604 = vmatpush1.msra.mxu0 0.0
    %605 = vmatprep.subr.mxu0 0.0
    %606 = vmatpush1.msra.mxu0 0.0
    %607 = vmatprep.subr.mxu0 0.0
    %608 = vmatpush1.msra.mxu0 0.0
    %609 = vmatprep.subr.mxu0 0.0
    %610 = vmatpush1.msra.mxu0 0.0
    %611 = vmatprep.mubr.f32.mxu0 0.0
    %612 = vmatmul.mubr.f32.gmra.mrb[0].mxu0 %v545
    %v613 = vpop.f32.mrb[0].mxu0
    %v614 = vadd.f32 0.0, %v613
    %v615 = vpop.f32.mrb[0].mxu0
    %v616 = vadd.f32 0.0, %v615
    %617 = vdwg.mxu0
    %v618 = vadd.f32 %v542, %v614
    %v619 = vadd.f32 %v543, %v616
    %v620 = vxor.u32 %v618, 2147483648
    %v621 = vxor.u32 %v619, 2147483648
    %v622 = vmul.f32 %v620, 1.442695
    %v623 = vpow.pop %v622
    %v624 = vmul.f32 %v621, 1.442695
    %v625 = vpow.pop %v624
    %v626 = vadd.f32 %v623, 1.0
    %v627 = vadd.f32 %v625, 1.0
    %v628 = vrcp.pop %v626
    %v629 = vmul.f32 1.0, %v628
    %v630 = vrcp.pop %v627
    %v631 = vmul.f32 1.0, %v630
    %v632 = vtanh.pop %v619
    %v633 = vmul.f32 %v629, %v535
    %635 = vrot.lane.b32.xlu0 %v632, 64
    %v636 = vpop.permute.xlu0 %635
    %v638 = vmul.f32 %v629, %v636
    %640 = vrot.lane.b32.xlu0 %v638, 64
    %v641 = vpop.permute.xlu0 %640
    %v643 = vadd.f32 %v633, %v641
    %v644 = vtanh.pop %v643
    %646 = vrot.lane.b32.xlu0 %v644, 64
    %v647 = vpop.permute.xlu0 %646
    %v649 = vmul.f32 %v631, %v647
    %v650 = vsel %vm431, %v395, %v413
    %v651 = vsel %vm432, %v397, %v415
    %v653 = vsel %vm435, %v649, 0
    %655 = vmatprep.subr.mxu0 %v263
    %656 = vmatpush1.msra.mxu0 %v262
    %657 = vmatprep.subr.mxu0 %v265
    %658 = vmatpush1.msra.mxu0 %v264
    %659 = vmatprep.subr.mxu0 %v267
    %660 = vmatpush1.msra.mxu0 %v266
    %661 = vmatprep.subr.mxu0 %v269
    %662 = vmatpush1.msra.mxu0 %v268
    %663 = vmatprep.subr.mxu0 %v271
    %664 = vmatpush1.msra.mxu0 %v270
    %665 = vmatprep.subr.mxu0 %v273
    %666 = vmatpush1.msra.mxu0 %v272
    %667 = vmatprep.subr.mxu0 %v275
    %668 = vmatpush1.msra.mxu0 %v274
    %669 = vmatprep.subr.mxu0 %v277
    %670 = vmatpush1.msra.mxu0 %v276
    %671 = vmatprep.subr.mxu0 0.0
    %672 = vmatpush1.msra.mxu0 0.0
    %673 = vmatprep.subr.mxu0 0.0
    %674 = vmatpush1.msra.mxu0 0.0
    %675 = vmatprep.subr.mxu0 0.0
    %676 = vmatpush1.msra.mxu0 0.0
    %677 = vmatprep.subr.mxu0 0.0
    %678 = vmatpush1.msra.mxu0 0.0
    %679 = vmatprep.subr.mxu0 0.0
    %680 = vmatpush1.msra.mxu0 0.0
    %681 = vmatprep.subr.mxu0 0.0
    %682 = vmatpush1.msra.mxu0 0.0
    %683 = vmatprep.subr.mxu0 0.0
    %684 = vmatpush1.msra.mxu0 0.0
    %685 = vmatprep.subr.mxu0 0.0
    %686 = vmatpush1.msra.mxu0 0.0
    %687 = vmatprep.subr.mxu0 0.0
    %688 = vmatpush1.msra.mxu0 0.0
    %689 = vmatprep.subr.mxu0 0.0
    %690 = vmatpush1.msra.mxu0 0.0
    %691 = vmatprep.subr.mxu0 0.0
    %692 = vmatpush1.msra.mxu0 0.0
    %693 = vmatprep.subr.mxu0 0.0
    %694 = vmatpush1.msra.mxu0 0.0
    %695 = vmatprep.subr.mxu0 0.0
    %696 = vmatpush1.msra.mxu0 0.0
    %697 = vmatprep.subr.mxu0 0.0
    %698 = vmatpush1.msra.mxu0 0.0
    %699 = vmatprep.subr.mxu0 0.0
    %700 = vmatpush1.msra.mxu0 0.0
    %701 = vmatprep.subr.mxu0 0.0
    %702 = vmatpush1.msra.mxu0 0.0
    %703 = vmatprep.subr.mxu0 0.0
    %704 = vmatpush1.msra.mxu0 0.0
    %705 = vmatprep.subr.mxu0 0.0
    %706 = vmatpush1.msra.mxu0 0.0
    %707 = vmatprep.subr.mxu0 0.0
    %708 = vmatpush1.msra.mxu0 0.0
    %709 = vmatprep.subr.mxu0 0.0
    %710 = vmatpush1.msra.mxu0 0.0
    %711 = vmatprep.subr.mxu0 0.0
    %712 = vmatpush1.msra.mxu0 0.0
    %713 = vmatprep.subr.mxu0 0.0
    %714 = vmatpush1.msra.mxu0 0.0
    %715 = vmatprep.subr.mxu0 0.0
    %716 = vmatpush1.msra.mxu0 0.0
    %717 = vmatprep.subr.mxu0 0.0
    %718 = vmatpush1.msra.mxu0 0.0
    %719 = vmatprep.mubr.f32.mxu0 0.0
    %720 = vmatmul.mubr.f32.gmra.mrb[0].mxu0 %v653
    %v721 = vpop.f32.mrb[0].mxu0
    %v722 = vadd.f32 0.0, %v721
    %v723 = vpop.f32.mrb[0].mxu0
    %v724 = vadd.f32 0.0, %v723
    %725 = vdwg.mxu0
    %v726 = vadd.f32 %v650, %v722
    %v727 = vadd.f32 %v651, %v724
    %v728 = vxor.u32 %v726, 2147483648
    %v729 = vxor.u32 %v727, 2147483648
    %v730 = vmul.f32 %v728, 1.442695
    %v731 = vpow.pop %v730
    %v732 = vmul.f32 %v729, 1.442695
    %v733 = vpow.pop %v732
    %v734 = vadd.f32 %v731, 1.0
    %v735 = vadd.f32 %v733, 1.0
    %v736 = vrcp.pop %v734
    %v737 = vmul.f32 1.0, %v736
    %v738 = vrcp.pop %v735
    %v739 = vmul.f32 1.0, %v738
    %v740 = vtanh.pop %v727
    %v741 = vmul.f32 %v737, %v643
    %743 = vrot.lane.b32.xlu0 %v740, 64
    %v744 = vpop.permute.xlu0 %743
    %v746 = vmul.f32 %v737, %v744
    %748 = vrot.lane.b32.xlu0 %v746, 64
    %v749 = vpop.permute.xlu0 %748
    %v751 = vadd.f32 %v741, %v749
    %v752 = vtanh.pop %v751
    %754 = vrot.lane.b32.xlu0 %v752, 64
    %v755 = vpop.permute.xlu0 %754
    %v757 = vmul.f32 %v739, %v755
    %v758 = vsel %vm431, %v401, %v407
    %v759 = vsel %vm432, %v403, %v409
    %v761 = vsel %vm435, %v757, 0
    %763 = vmatprep.subr.mxu0 %v263
    %764 = vmatpush1.msra.mxu0 %v262
    %765 = vmatprep.subr.mxu0 %v265
    %766 = vmatpush1.msra.mxu0 %v264
    %767 = vmatprep.subr.mxu0 %v267
    %768 = vmatpush1.msra.mxu0 %v266
    %769 = vmatprep.subr.mxu0 %v269
    %770 = vmatpush1.msra.mxu0 %v268
    %771 = vmatprep.subr.mxu0 %v271
    %772 = vmatpush1.msra.mxu0 %v270
    %773 = vmatprep.subr.mxu0 %v273
    %774 = vmatpush1.msra.mxu0 %v272
    %775 = vmatprep.subr.mxu0 %v275
    %776 = vmatpush1.msra.mxu0 %v274
    %777 = vmatprep.subr.mxu0 %v277
    %778 = vmatpush1.msra.mxu0 %v276
    %779 = vmatprep.subr.mxu0 0.0
    %780 = vmatpush1.msra.mxu0 0.0
    %781 = vmatprep.subr.mxu0 0.0
    %782 = vmatpush1.msra.mxu0 0.0
    %783 = vmatprep.subr.mxu0 0.0
    %784 = vmatpush1.msra.mxu0 0.0
    %785 = vmatprep.subr.mxu0 0.0
    %786 = vmatpush1.msra.mxu0 0.0
    %787 = vmatprep.subr.mxu0 0.0
    %788 = vmatpush1.msra.mxu0 0.0
    %789 = vmatprep.subr.mxu0 0.0
    %790 = vmatpush1.msra.mxu0 0.0
    %791 = vmatprep.subr.mxu0 0.0
    %792 = vmatpush1.msra.mxu0 0.0
    %793 = vmatprep.subr.mxu0 0.0
    %794 = vmatpush1.msra.mxu0 0.0
    %795 = vmatprep.subr.mxu0 0.0
    %796 = vmatpush1.msra.mxu0 0.0
    %797 = vmatprep.subr.mxu0 0.0
    %798 = vmatpush1.msra.mxu0 0.0
    %799 = vmatprep.subr.mxu0 0.0
    %800 = vmatpush1.msra.mxu0 0.0
    %801 = vmatprep.subr.mxu0 0.0
    %802 = vmatpush1.msra.mxu0 0.0
    %803 = vmatprep.subr.mxu0 0.0
    %804 = vmatpush1.msra.mxu0 0.0
    %805 = vmatprep.subr.mxu0 0.0
    %806 = vmatpush1.msra.mxu0 0.0
    %807 = vmatprep.subr.mxu0 0.0
    %808 = vmatpush1.msra.mxu0 0.0
    %809 = vmatprep.subr.mxu0 0.0
    %810 = vmatpush1.msra.mxu0 0.0
    %811 = vmatprep.subr.mxu0 0.0
    %812 = vmatpush1.msra.mxu0 0.0
    %813 = vmatprep.subr.mxu0 0.0
    %814 = vmatpush1.msra.mxu0 0.0
    %815 = vmatprep.subr.mxu0 0.0
    %816 = vmatpush1.msra.mxu0 0.0
    %817 = vmatprep.subr.mxu0 0.0
    %818 = vmatpush1.msra.mxu0 0.0
    %819 = vmatprep.subr.mxu0 0.0
    %820 = vmatpush1.msra.mxu0 0.0
    %821 = vmatprep.subr.mxu0 0.0
    %822 = vmatpush1.msra.mxu0 0.0
    %823 = vmatprep.subr.mxu0 0.0
    %824 = vmatpush1.msra.mxu0 0.0
    %825 = vmatprep.subr.mxu0 0.0
    %826 = vmatpush1.msra.mxu0 0.0
    %827 = vmatprep.mubr.f32.mxu0 0.0
    %828 = vmatmul.mubr.f32.gmra.mrb[0].mxu0 %v761
    %v829 = vpop.f32.mrb[0].mxu0
    %v830 = vadd.f32 0.0, %v829
    %v831 = vpop.f32.mrb[0].mxu0
    %v832 = vadd.f32 0.0, %v831
    %833 = vdwg.mxu0
    %v834 = vadd.f32 %v758, %v830
    %v835 = vadd.f32 %v759, %v832
    %v836 = vxor.u32 %v834, 2147483648
    %v837 = vxor.u32 %v835, 2147483648
    %v838 = vmul.f32 %v836, 1.442695
    %v839 = vpow.pop %v838
    %v840 = vmul.f32 %v837, 1.442695
    %v841 = vpow.pop %v840
    %v842 = vadd.f32 %v839, 1.0
    %v843 = vadd.f32 %v841, 1.0
    %v844 = vrcp.pop %v842
    %v845 = vmul.f32 1.0, %v844
    %v846 = vrcp.pop %v843
    %v847 = vmul.f32 1.0, %v846
    %v848 = vtanh.pop %v835
    %v849 = vmul.f32 %v845, %v751
    %851 = vrot.lane.b32.xlu0 %v848, 64
    %v852 = vpop.permute.xlu0 %851
    %v854 = vmul.f32 %v845, %v852
    %856 = vrot.lane.b32.xlu0 %v854, 64
    %v857 = vpop.permute.xlu0 %856
    %v859 = vadd.f32 %v849, %v857
    %v860 = vtanh.pop %v859
    %862 = vrot.lane.b32.xlu0 %v860, 64
    %v863 = vpop.permute.xlu0 %862
    %v865 = vmul.f32 %v847, %v863
    %v866 = vsel %vm431, %v407, %v401
    %v867 = vsel %vm432, %v409, %v403
    %v869 = vsel %vm435, %v865, 0
    %871 = vmatprep.subr.mxu0 %v263
    %872 = vmatpush1.msra.mxu0 %v262
    %873 = vmatprep.subr.mxu0 %v265
    %874 = vmatpush1.msra.mxu0 %v264
    %875 = vmatprep.subr.mxu0 %v267
    %876 = vmatpush1.msra.mxu0 %v266
    %877 = vmatprep.subr.mxu0 %v269
    %878 = vmatpush1.msra.mxu0 %v268
    %879 = vmatprep.subr.mxu0 %v271
    %880 = vmatpush1.msra.mxu0 %v270
    %881 = vmatprep.subr.mxu0 %v273
    %882 = vmatpush1.msra.mxu0 %v272
    %883 = vmatprep.subr.mxu0 %v275
    %884 = vmatpush1.msra.mxu0 %v274
    %885 = vmatprep.subr.mxu0 %v277
    %886 = vmatpush1.msra.mxu0 %v276
    %887 = vmatprep.subr.mxu0 0.0
    %888 = vmatpush1.msra.mxu0 0.0
    %889 = vmatprep.subr.mxu0 0.0
    %890 = vmatpush1.msra.mxu0 0.0
    %891 = vmatprep.subr.mxu0 0.0
    %892 = vmatpush1.msra.mxu0 0.0
    %893 = vmatprep.subr.mxu0 0.0
    %894 = vmatpush1.msra.mxu0 0.0
    %895 = vmatprep.subr.mxu0 0.0
    %896 = vmatpush1.msra.mxu0 0.0
    %897 = vmatprep.subr.mxu0 0.0
    %898 = vmatpush1.msra.mxu0 0.0
    %899 = vmatprep.subr.mxu0 0.0
    %900 = vmatpush1.msra.mxu0 0.0
    %901 = vmatprep.subr.mxu0 0.0
    %902 = vmatpush1.msra.mxu0 0.0
    %903 = vmatprep.subr.mxu0 0.0
    %904 = vmatpush1.msra.mxu0 0.0
    %905 = vmatprep.subr.mxu0 0.0
    %906 = vmatpush1.msra.mxu0 0.0
    %907 = vmatprep.subr.mxu0 0.0
    %908 = vmatpush1.msra.mxu0 0.0
    %909 = vmatprep.subr.mxu0 0.0
    %910 = vmatpush1.msra.mxu0 0.0
    %911 = vmatprep.subr.mxu0 0.0
    %912 = vmatpush1.msra.mxu0 0.0
    %913 = vmatprep.subr.mxu0 0.0
    %914 = vmatpush1.msra.mxu0 0.0
    %915 = vmatprep.subr.mxu0 0.0
    %916 = vmatpush1.msra.mxu0 0.0
    %917 = vmatprep.subr.mxu0 0.0
    %918 = vmatpush1.msra.mxu0 0.0
    %919 = vmatprep.subr.mxu0 0.0
    %920 = vmatpush1.msra.mxu0 0.0
    %921 = vmatprep.subr.mxu0 0.0
    %922 = vmatpush1.msra.mxu0 0.0
    %923 = vmatprep.subr.mxu0 0.0
    %924 = vmatpush1.msra.mxu0 0.0
    %925 = vmatprep.subr.mxu0 0.0
    %926 = vmatpush1.msra.mxu0 0.0
    %927 = vmatprep.subr.mxu0 0.0
    %928 = vmatpush1.msra.mxu0 0.0
    %929 = vmatprep.subr.mxu0 0.0
    %930 = vmatpush1.msra.mxu0 0.0
    %931 = vmatprep.subr.mxu0 0.0
    %932 = vmatpush1.msra.mxu0 0.0
    %933 = vmatprep.subr.mxu0 0.0
    %934 = vmatpush1.msra.mxu0 0.0
    %935 = vmatprep.mubr.f32.mxu0 0.0
    %936 = vmatmul.mubr.f32.gmra.mrb[0].mxu0 %v869
    %v937 = vpop.f32.mrb[0].mxu0
    %v938 = vadd.f32 0.0, %v937
    %v939 = vpop.f32.mrb[0].mxu0
    %v940 = vadd.f32 0.0, %v939
    %941 = vdwg.mxu0
    %v942 = vadd.f32 %v866, %v938
    %v943 = vadd.f32 %v867, %v940
    %v944 = vxor.u32 %v942, 2147483648
    %v945 = vxor.u32 %v943, 2147483648
    %v946 = vmul.f32 %v944, 1.442695
    %v947 = vpow.pop %v946
    %v948 = vmul.f32 %v945, 1.442695
    %v949 = vpow.pop %v948
    %v950 = vadd.f32 %v947, 1.0
    %v951 = vadd.f32 %v949, 1.0
    %v952 = vrcp.pop %v950
    %v953 = vmul.f32 1.0, %v952
    %v954 = vrcp.pop %v951
    %v955 = vmul.f32 1.0, %v954
    %v956 = vtanh.pop %v943
    %v957 = vmul.f32 %v953, %v859
    %959 = vrot.lane.b32.xlu0 %v956, 64
    %v960 = vpop.permute.xlu0 %959
    %v962 = vmul.f32 %v953, %v960
    %964 = vrot.lane.b32.xlu0 %v962, 64
    %v965 = vpop.permute.xlu0 %964
    %v967 = vadd.f32 %v957, %v965
    %v968 = vtanh.pop %v967
    %970 = vrot.lane.b32.xlu0 %v968, 64
    %v971 = vpop.permute.xlu0 %970
    %v973 = vmul.f32 %v955, %v971
    %v974 = vsel %vm431, %v413, %v395
    %v975 = vsel %vm432, %v415, %v397
    %v977 = vsel %vm435, %v973, 0
    %979 = vmatprep.subr.mxu0 %v263
    %980 = vmatpush1.msra.mxu0 %v262
    %981 = vmatprep.subr.mxu0 %v265
    %982 = vmatpush1.msra.mxu0 %v264
    %983 = vmatprep.subr.mxu0 %v267
    %984 = vmatpush1.msra.mxu0 %v266
    %985 = vmatprep.subr.mxu0 %v269
    %986 = vmatpush1.msra.mxu0 %v268
    %987 = vmatprep.subr.mxu0 %v271
    %988 = vmatpush1.msra.mxu0 %v270
    %989 = vmatprep.subr.mxu0 %v273
    %990 = vmatpush1.msra.mxu0 %v272
    %991 = vmatprep.subr.mxu0 %v275
    %992 = vmatpush1.msra.mxu0 %v274
    %993 = vmatprep.subr.mxu0 %v277
    %994 = vmatpush1.msra.mxu0 %v276
    %995 = vmatprep.subr.mxu0 0.0
    %996 = vmatpush1.msra.mxu0 0.0
    %997 = vmatprep.subr.mxu0 0.0
    %998 = vmatpush1.msra.mxu0 0.0
    %999 = vmatprep.subr.mxu0 0.0
    %1000 = vmatpush1.msra.mxu0 0.0
    %1001 = vmatprep.subr.mxu0 0.0
    %1002 = vmatpush1.msra.mxu0 0.0
    %1003 = vmatprep.subr.mxu0 0.0
    %1004 = vmatpush1.msra.mxu0 0.0
    %1005 = vmatprep.subr.mxu0 0.0
    %1006 = vmatpush1.msra.mxu0 0.0
    %1007 = vmatprep.subr.mxu0 0.0
    %1008 = vmatpush1.msra.mxu0 0.0
    %1009 = vmatprep.subr.mxu0 0.0
    %1010 = vmatpush1.msra.mxu0 0.0
    %1011 = vmatprep.subr.mxu0 0.0
    %1012 = vmatpush1.msra.mxu0 0.0
    %1013 = vmatprep.subr.mxu0 0.0
    %1014 = vmatpush1.msra.mxu0 0.0
    %1015 = vmatprep.subr.mxu0 0.0
    %1016 = vmatpush1.msra.mxu0 0.0
    %1017 = vmatprep.subr.mxu0 0.0
    %1018 = vmatpush1.msra.mxu0 0.0
    %1019 = vmatprep.subr.mxu0 0.0
    %1020 = vmatpush1.msra.mxu0 0.0
    %1021 = vmatprep.subr.mxu0 0.0
    %1022 = vmatpush1.msra.mxu0 0.0
    %1023 = vmatprep.subr.mxu0 0.0
    %1024 = vmatpush1.msra.mxu0 0.0
    %1025 = vmatprep.subr.mxu0 0.0
    %1026 = vmatpush1.msra.mxu0 0.0
    %1027 = vmatprep.subr.mxu0 0.0
    %1028 = vmatpush1.msra.mxu0 0.0
    %1029 = vmatprep.subr.mxu0 0.0
    %1030 = vmatpush1.msra.mxu0 0.0
    %1031 = vmatprep.subr.mxu0 0.0
    %1032 = vmatpush1.msra.mxu0 0.0
    %1033 = vmatprep.subr.mxu0 0.0
    %1034 = vmatpush1.msra.mxu0 0.0
    %1035 = vmatprep.subr.mxu0 0.0
    %1036 = vmatpush1.msra.mxu0 0.0
    %1037 = vmatprep.subr.mxu0 0.0
    %1038 = vmatpush1.msra.mxu0 0.0
    %1039 = vmatprep.subr.mxu0 0.0
    %1040 = vmatpush1.msra.mxu0 0.0
    %1041 = vmatprep.subr.mxu0 0.0
    %1042 = vmatpush1.msra.mxu0 0.0
    %1043 = vmatprep.mubr.f32.mxu0 0.0
    %1044 = vmatmul.mubr.f32.gmra.mrb[0].mxu0 %v977
    %v1045 = vpop.f32.mrb[0].mxu0
    %v1046 = vadd.f32 0.0, %v1045
    %v1047 = vpop.f32.mrb[0].mxu0
    %v1048 = vadd.f32 0.0, %v1047
    %1049 = vdwg.mxu0
    %v1050 = vadd.f32 %v974, %v1046
    %v1051 = vadd.f32 %v975, %v1048
    %v1052 = vxor.u32 %v1050, 2147483648
    %v1053 = vxor.u32 %v1051, 2147483648
    %v1054 = vmul.f32 %v1052, 1.442695
    %v1055 = vpow.pop %v1054
    %v1056 = vmul.f32 %v1053, 1.442695
    %v1057 = vpow.pop %v1056
    %v1058 = vadd.f32 %v1055, 1.0
    %v1059 = vadd.f32 %v1057, 1.0
    %v1060 = vrcp.pop %v1058
    %v1061 = vmul.f32 1.0, %v1060
    %v1062 = vrcp.pop %v1059
    %v1063 = vmul.f32 1.0, %v1062
    %v1064 = vtanh.pop %v1051
    %v1065 = vmul.f32 %v1061, %v967
    %1067 = vrot.lane.b32.xlu0 %v1064, 64
    %v1068 = vpop.permute.xlu0 %1067
    %v1070 = vmul.f32 %v1061, %v1068
    %1072 = vrot.lane.b32.xlu0 %v1070, 64
    %v1073 = vpop.permute.xlu0 %1072
    %v1075 = vadd.f32 %v1065, %v1073
    %v1076 = vtanh.pop %v1075
    %1078 = vrot.lane.b32.xlu0 %v1076, 64
    %v1079 = vpop.permute.xlu0 %1078
    %v1081 = vmul.f32 %v1063, %v1079
    %v1082 = vsel %vm431, %v419, %v389
    %v1083 = vsel %vm432, %v421, %v391
    %v1085 = vsel %vm435, %v1081, 0
    %1087 = vmatprep.subr.mxu0 %v263
    %1088 = vmatpush1.msra.mxu0 %v262
    %1089 = vmatprep.subr.mxu0 %v265
    %1090 = vmatpush1.msra.mxu0 %v264
    %1091 = vmatprep.subr.mxu0 %v267
    %1092 = vmatpush1.msra.mxu0 %v266
    %1093 = vmatprep.subr.mxu0 %v269
    %1094 = vmatpush1.msra.mxu0 %v268
    %1095 = vmatprep.subr.mxu0 %v271
    %1096 = vmatpush1.msra.mxu0 %v270
    %1097 = vmatprep.subr.mxu0 %v273
    %1098 = vmatpush1.msra.mxu0 %v272
    %1099 = vmatprep.subr.mxu0 %v275
    %1100 = vmatpush1.msra.mxu0 %v274
    %1101 = vmatprep.subr.mxu0 %v277
    %1102 = vmatpush1.msra.mxu0 %v276
    %1103 = vmatprep.subr.mxu0 0.0
    %1104 = vmatpush1.msra.mxu0 0.0
    %1105 = vmatprep.subr.mxu0 0.0
    %1106 = vmatpush1.msra.mxu0 0.0
    %1107 = vmatprep.subr.mxu0 0.0
    %1108 = vmatpush1.msra.mxu0 0.0
    %1109 = vmatprep.subr.mxu0 0.0
    %1110 = vmatpush1.msra.mxu0 0.0
    %1111 = vmatprep.subr.mxu0 0.0
    %1112 = vmatpush1.msra.mxu0 0.0
    %1113 = vmatprep.subr.mxu0 0.0
    %1114 = vmatpush1.msra.mxu0 0.0
    %1115 = vmatprep.subr.mxu0 0.0
    %1116 = vmatpush1.msra.mxu0 0.0
    %1117 = vmatprep.subr.mxu0 0.0
    %1118 = vmatpush1.msra.mxu0 0.0
    %1119 = vmatprep.subr.mxu0 0.0
    %1120 = vmatpush1.msra.mxu0 0.0
    %1121 = vmatprep.subr.mxu0 0.0
    %1122 = vmatpush1.msra.mxu0 0.0
    %1123 = vmatprep.subr.mxu0 0.0
    %1124 = vmatpush1.msra.mxu0 0.0
    %1125 = vmatprep.subr.mxu0 0.0
    %1126 = vmatpush1.msra.mxu0 0.0
    %1127 = vmatprep.subr.mxu0 0.0
    %1128 = vmatpush1.msra.mxu0 0.0
    %1129 = vmatprep.subr.mxu0 0.0
    %1130 = vmatpush1.msra.mxu0 0.0
    %1131 = vmatprep.subr.mxu0 0.0
    %1132 = vmatpush1.msra.mxu0 0.0
    %1133 = vmatprep.subr.mxu0 0.0
    %1134 = vmatpush1.msra.mxu0 0.0
    %1135 = vmatprep.subr.mxu0 0.0
    %1136 = vmatpush1.msra.mxu0 0.0
    %1137 = vmatprep.subr.mxu0 0.0
    %1138 = vmatpush1.msra.mxu0 0.0
    %1139 = vmatprep.subr.mxu0 0.0
    %1140 = vmatpush1.msra.mxu0 0.0
    %1141 = vmatprep.subr.mxu0 0.0
    %1142 = vmatpush1.msra.mxu0 0.0
    %1143 = vmatprep.subr.mxu0 0.0
    %1144 = vmatpush1.msra.mxu0 0.0
    %1145 = vmatprep.subr.mxu0 0.0
    %1146 = vmatpush1.msra.mxu0 0.0
    %1147 = vmatprep.subr.mxu0 0.0
    %1148 = vmatpush1.msra.mxu0 0.0
    %1149 = vmatprep.subr.mxu0 0.0
    %1150 = vmatpush1.msra.mxu0 0.0
    %1151 = vmatprep.mubr.f32.mxu0 0.0
    %1152 = vmatmul.mubr.f32.gmra.mrb[0].mxu0 %v1085
    %v1153 = vpop.f32.mrb[0].mxu0
    %v1154 = vadd.f32 0.0, %v1153
    %v1155 = vpop.f32.mrb[0].mxu0
    %v1156 = vadd.f32 0.0, %v1155
    %1157 = vdwg.mxu0
    %v1158 = vadd.f32 %v1082, %v1154
    %v1159 = vadd.f32 %v1083, %v1156
    %v1160 = vxor.u32 %v1158, 2147483648
    %v1161 = vxor.u32 %v1159, 2147483648
    %v1162 = vmul.f32 %v1160, 1.442695
    %v1163 = vpow.pop %v1162
    %v1164 = vmul.f32 %v1161, 1.442695
    %v1165 = vpow.pop %v1164
    %v1166 = vadd.f32 %v1163, 1.0
    %v1167 = vadd.f32 %v1165, 1.0
    %v1168 = vrcp.pop %v1166
    %v1169 = vmul.f32 1.0, %v1168
    %v1170 = vrcp.pop %v1167
    %v1171 = vmul.f32 1.0, %v1170
    %v1172 = vtanh.pop %v1159
    %v1173 = vmul.f32 %v1169, %v1075
    %1175 = vrot.lane.b32.xlu0 %v1172, 64
    %v1176 = vpop.permute.xlu0 %1175
    %v1178 = vmul.f32 %v1169, %v1176
    %1180 = vrot.lane.b32.xlu0 %v1178, 64
    %v1181 = vpop.permute.xlu0 %1180
    %v1183 = vadd.f32 %v1173, %v1181
    %v1184 = vtanh.pop %v1183
    %1186 = vrot.lane.b32.xlu0 %v1184, 64
    %v1187 = vpop.permute.xlu0 %1186
    %v1189 = vmul.f32 %v1171, %v1187
    %v1190 = vsel %vm431, %v425, %v383
    %v1191 = vsel %vm432, %v427, %v385
    %v1193 = vsel %vm435, %v1189, 0
    %1195 = vmatprep.subr.mxu0 %v263
    %1196 = vmatpush1.msra.mxu0 %v262
    %1197 = vmatprep.subr.mxu0 %v265
    %1198 = vmatpush1.msra.mxu0 %v264
    %1199 = vmatprep.subr.mxu0 %v267
    %1200 = vmatpush1.msra.mxu0 %v266
    %1201 = vmatprep.subr.mxu0 %v269
    %1202 = vmatpush1.msra.mxu0 %v268
    %1203 = vmatprep.subr.mxu0 %v271
    %1204 = vmatpush1.msra.mxu0 %v270
    %1205 = vmatprep.subr.mxu0 %v273
    %1206 = vmatpush1.msra.mxu0 %v272
    %1207 = vmatprep.subr.mxu0 %v275
    %1208 = vmatpush1.msra.mxu0 %v274
    %1209 = vmatprep.subr.mxu0 %v277
    %1210 = vmatpush1.msra.mxu0 %v276
    %1211 = vmatprep.subr.mxu0 0.0
    %1212 = vmatpush1.msra.mxu0 0.0
    %1213 = vmatprep.subr.mxu0 0.0
    %1214 = vmatpush1.msra.mxu0 0.0
    %1215 = vmatprep.subr.mxu0 0.0
    %1216 = vmatpush1.msra.mxu0 0.0
    %1217 = vmatprep.subr.mxu0 0.0
    %1218 = vmatpush1.msra.mxu0 0.0
    %1219 = vmatprep.subr.mxu0 0.0
    %1220 = vmatpush1.msra.mxu0 0.0
    %1221 = vmatprep.subr.mxu0 0.0
    %1222 = vmatpush1.msra.mxu0 0.0
    %1223 = vmatprep.subr.mxu0 0.0
    %1224 = vmatpush1.msra.mxu0 0.0
    %1225 = vmatprep.subr.mxu0 0.0
    %1226 = vmatpush1.msra.mxu0 0.0
    %1227 = vmatprep.subr.mxu0 0.0
    %1228 = vmatpush1.msra.mxu0 0.0
    %1229 = vmatprep.subr.mxu0 0.0
    %1230 = vmatpush1.msra.mxu0 0.0
    %1231 = vmatprep.subr.mxu0 0.0
    %1232 = vmatpush1.msra.mxu0 0.0
    %1233 = vmatprep.subr.mxu0 0.0
    %1234 = vmatpush1.msra.mxu0 0.0
    %1235 = vmatprep.subr.mxu0 0.0
    %1236 = vmatpush1.msra.mxu0 0.0
    %1237 = vmatprep.subr.mxu0 0.0
    %1238 = vmatpush1.msra.mxu0 0.0
    %1239 = vmatprep.subr.mxu0 0.0
    %1240 = vmatpush1.msra.mxu0 0.0
    %1241 = vmatprep.subr.mxu0 0.0
    %1242 = vmatpush1.msra.mxu0 0.0
    %1243 = vmatprep.subr.mxu0 0.0
    %1244 = vmatpush1.msra.mxu0 0.0
    %1245 = vmatprep.subr.mxu0 0.0
    %1246 = vmatpush1.msra.mxu0 0.0
    %1247 = vmatprep.subr.mxu0 0.0
    %1248 = vmatpush1.msra.mxu0 0.0
    %1249 = vmatprep.subr.mxu0 0.0
    %1250 = vmatpush1.msra.mxu0 0.0
    %1251 = vmatprep.subr.mxu0 0.0
    %1252 = vmatpush1.msra.mxu0 0.0
    %1253 = vmatprep.subr.mxu0 0.0
    %1254 = vmatpush1.msra.mxu0 0.0
    %1255 = vmatprep.subr.mxu0 0.0
    %1256 = vmatpush1.msra.mxu0 0.0
    %1257 = vmatprep.subr.mxu0 0.0
    %1258 = vmatpush1.msra.mxu0 0.0
    %1259 = vmatprep.mubr.f32.mxu0 0.0
    %1260 = vmatmul.mubr.f32.gmra.mrb[0].mxu0 %v1193
    %v1261 = vpop.f32.mrb[0].mxu0
    %v1262 = vadd.f32 0.0, %v1261
    %v1263 = vpop.f32.mrb[0].mxu0
    %v1264 = vadd.f32 0.0, %v1263
    %1265 = vdwg.mxu0
    %v1266 = vadd.f32 %v1190, %v1262
    %v1267 = vadd.f32 %v1191, %v1264
    %v1268 = vxor.u32 %v1266, 2147483648
    %v1269 = vxor.u32 %v1267, 2147483648
    %v1270 = vmul.f32 %v1268, 1.442695
    %v1271 = vpow.pop %v1270
    %v1272 = vmul.f32 %v1269, 1.442695
    %v1273 = vpow.pop %v1272
    %v1274 = vadd.f32 %v1271, 1.0
    %v1275 = vadd.f32 %v1273, 1.0
    %v1276 = vrcp.pop %v1274
    %v1277 = vmul.f32 1.0, %v1276
    %v1278 = vrcp.pop %v1275
    %v1279 = vmul.f32 1.0, %v1278
    %v1280 = vtanh.pop %v1267
    %v1281 = vmul.f32 %v1277, %v1183
    %1283 = vrot.lane.b32.xlu0 %v1280, 64
    %v1284 = vpop.permute.xlu0 %1283
    %v1286 = vmul.f32 %v1277, %v1284
    %1288 = vrot.lane.b32.xlu0 %v1286, 64
    %v1289 = vpop.permute.xlu0 %1288
    %v1291 = vadd.f32 %v1281, %v1289
    %v1292 = vtanh.pop %v1291
    %1294 = vrot.lane.b32.xlu0 %v1292, 64
    %v1295 = vpop.permute.xlu0 %1294
    %v1297 = vmul.f32 %v1279, %v1295
    %v1298 = vsel %vm33, 1, 0
    %vm1299 = vcmp.eq.s32.totalorder %v1298, 1
    %v1300 = vsel %vm1299, %v541, %v1297
    %v1301 = vsel %vm1299, %v649, %v1189
    %v1302 = vsel %vm1299, %v757, %v1081
    %v1303 = vsel %vm1299, %v865, %v973
    %v1304 = vsel %vm1299, %v973, %v865
    %v1305 = vsel %vm1299, %v1081, %v757
    %v1306 = vsel %vm1299, %v1189, %v649
    %v1307 = vsel %vm1299, %v1297, %v541
    %v1308 = vld [vmem:[#allocation2 + $0xd0] sm:$0xff]
    %v1309 = vld [vmem:[#allocation2 + $0xd8] sm:$0xff]
    %v1310 = vld [vmem:[#allocation2 + $0xe0] sm:$0xff]
    %v1311 = vld [vmem:[#allocation2 + $0xe8] sm:$0xff]
    %v1312 = vld [vmem:[#allocation2 + $0xf0] sm:$0xff]
    %v1313 = vld [vmem:[#allocation2 + $0xf8] sm:$0xff]
    %v1314 = vld [vmem:[#allocation2 + $0x100] sm:$0xff]
    %v1315 = vld [vmem:[#allocation2 + $0x108] sm:$0xff]
    %v1316 = vld [vmem:[#allocation2 + $0x110] sm:$0xff]
    %v1317 = vld [vmem:[#allocation2 + $0x118] sm:$0xff]
    %v1318 = vld [vmem:[#allocation2 + $0x120] sm:$0xff]
    %v1319 = vld [vmem:[#allocation2 + $0x128] sm:$0xff]
    %v1320 = vld [vmem:[#allocation2 + $0x130] sm:$0xff]
    %v1321 = vld [vmem:[#allocation2 + $0x138] sm:$0xff]
    %v1322 = vld [vmem:[#allocation2 + $0x140] sm:$0xff]
    %v1323 = vld [vmem:[#allocation2 + $0x148] sm:$0xff]
    %v1324 = vld [vmem:[#allocation2 + $0x150] sm:$0xff]
    %v1325 = vld [vmem:[#allocation2 + $0x158] sm:$0xff]
    %v1326 = vld [vmem:[#allocation2 + $0x160] sm:$0xff]
    %v1327 = vld [vmem:[#allocation2 + $0x168] sm:$0xff]
    %v1328 = vld [vmem:[#allocation2 + $0x170] sm:$0xff]
    %v1329 = vld [vmem:[#allocation2 + $0x178] sm:$0xff]
    %v1330 = vld [vmem:[#allocation2 + $0x180] sm:$0xff]
    %v1331 = vld [vmem:[#allocation2 + $0x188] sm:$0xff]
    %v1332 = vld [vmem:[#allocation2 + $0x190] sm:$0xff]
    %v1333 = vld [vmem:[#allocation2 + $0x198] sm:$0xff]
    %v1334 = vld [vmem:[#allocation2 + $0x1a0] sm:$0xff]
    %v1335 = vld [vmem:[#allocation2 + $0x1a8] sm:$0xff]
    %v1336 = vld [vmem:[#allocation2 + $0x1b0] sm:$0xff]
    %v1337 = vld [vmem:[#allocation2 + $0x1b8] sm:$0xff]
    %v1338 = vld [vmem:[#allocation2 + $0x1c0] sm:$0xff]
    %v1339 = vld [vmem:[#allocation2 + $0x1c8] sm:$0xff]
    %s1340 = scalar_lea.vmem [#allocation2], 464
    %v1341 = vld [vmem:[%s1340] ss:$8 sm:$0x3]
    %v1343 = vlaneseq
    %v1344 = vshrl.u32 %v1343, 7
    %v1345 = vsub.s32 0, %v1344
    %v1346 = vrot.slane %v1341, %v1345
    %v1347 = vlaneseq
    %v1348 = vshrl.u32 %v1347, 7
    %v1349 = vsub.s32 1, %v1348
    %v1350 = vrot.slane %v1341, %v1349
    %v1354 = vsel %vm435, %v1300, 0
    %v1357 = vsel %vm435, %v1301, 0
    %v1360 = vsel %vm435, %v1302, 0
    %v1363 = vsel %vm435, %v1303, 0
    %v1366 = vsel %vm435, %v1304, 0
    %v1369 = vsel %vm435, %v1305, 0
    %v1372 = vsel %vm435, %v1306, 0
    %v1375 = vsel %vm435, %v1307, 0
    %1377 = vmatprep.subr.mxu0 %v1309
    %1378 = vmatpush1.msra.mxu0 %v1308
    %1379 = vmatprep.subr.mxu0 %v1311
    %1380 = vmatpush1.msra.mxu0 %v1310
    %1381 = vmatprep.subr.mxu0 %v1313
    %1382 = vmatpush1.msra.mxu0 %v1312
    %1383 = vmatprep.subr.mxu0 %v1315
    %1384 = vmatpush1.msra.mxu0 %v1314
    %1385 = vmatprep.subr.mxu0 %v1317
    %1386 = vmatpush1.msra.mxu0 %v1316
    %1387 = vmatprep.subr.mxu0 %v1319
    %1388 = vmatpush1.msra.mxu0 %v1318
    %1389 = vmatprep.subr.mxu0 %v1321
    %1390 = vmatpush1.msra.mxu0 %v1320
    %1391 = vmatprep.subr.mxu0 %v1323
    %1392 = vmatpush1.msra.mxu0 %v1322
    %1393 = vmatprep.subr.mxu0 0.0
    %1394 = vmatpush1.msra.mxu0 0.0
    %1395 = vmatprep.subr.mxu0 0.0
    %1396 = vmatpush1.msra.mxu0 0.0
    %1397 = vmatprep.subr.mxu0 0.0
    %1398 = vmatpush1.msra.mxu0 0.0
    %1399 = vmatprep.subr.mxu0 0.0
    %1400 = vmatpush1.msra.mxu0 0.0
    %1401 = vmatprep.subr.mxu0 0.0
    %1402 = vmatpush1.msra.mxu0 0.0
    %1403 = vmatprep.subr.mxu0 0.0
    %1404 = vmatpush1.msra.mxu0 0.0
    %1405 = vmatprep.subr.mxu0 0.0
    %1406 = vmatpush1.msra.mxu0 0.0
    %1407 = vmatprep.subr.mxu0 0.0
    %1408 = vmatpush1.msra.mxu0 0.0
    %1409 = vmatprep.subr.mxu0 0.0
    %1410 = vmatpush1.msra.mxu0 0.0
    %1411 = vmatprep.subr.mxu0 0.0
    %1412 = vmatpush1.msra.mxu0 0.0
    %1413 = vmatprep.subr.mxu0 0.0
    %1414 = vmatpush1.msra.mxu0 0.0
    %1415 = vmatprep.subr.mxu0 0.0
    %1416 = vmatpush1.msra.mxu0 0.0
    %1417 = vmatprep.subr.mxu0 0.0
    %1418 = vmatpush1.msra.mxu0 0.0
    %1419 = vmatprep.subr.mxu0 0.0
    %1420 = vmatpush1.msra.mxu0 0.0
    %1421 = vmatprep.subr.mxu0 0.0
    %1422 = vmatpush1.msra.mxu0 0.0
    %1423 = vmatprep.subr.mxu0 0.0
    %1424 = vmatpush1.msra.mxu0 0.0
    %1425 = vmatprep.subr.mxu0 0.0
    %1426 = vmatpush1.msra.mxu0 0.0
    %1427 = vmatprep.subr.mxu0 0.0
    %1428 = vmatpush1.msra.mxu0 0.0
    %1429 = vmatprep.subr.mxu0 0.0
    %1430 = vmatpush1.msra.mxu0 0.0
    %1431 = vmatprep.subr.mxu0 0.0
    %1432 = vmatpush1.msra.mxu0 0.0
    %1433 = vmatprep.subr.mxu0 0.0
    %1434 = vmatpush1.msra.mxu0 0.0
    %1435 = vmatprep.subr.mxu0 0.0
    %1436 = vmatpush1.msra.mxu0 0.0
    %1437 = vmatprep.subr.mxu0 0.0
    %1438 = vmatpush1.msra.mxu0 0.0
    %1439 = vmatprep.subr.mxu0 0.0
    %1440 = vmatpush1.msra.mxu0 0.0
    %1441 = vmatprep.mubr.f32.mxu0 0.0
    %1442 = vmatmul.mubr.f32.gmra.mrb[0].mxu0 %v1354
    %v1443 = vpop.f32.mrb[0].mxu0
    %v1444 = vadd.f32 %v1346, %v1443
    %v1445 = vpop.f32.mrb[0].mxu0
    %v1446 = vadd.f32 %v1350, %v1445
    %1447 = vmatprep.mubr.f32.mxu0 0.0
    %1448 = vmatmul.mubr.f32.gmra.mrb[0].mxu0 %v1357
    %v1449 = vpop.f32.mrb[0].mxu0
    %v1450 = vadd.f32 %v1346, %v1449
    %v1451 = vpop.f32.mrb[0].mxu0
    %v1452 = vadd.f32 %v1350, %v1451
    %1453 = vmatprep.mubr.f32.mxu0 0.0
    %1454 = vmatmul.mubr.f32.gmra.mrb[0].mxu0 %v1360
    %v1455 = vpop.f32.mrb[0].mxu0
    %v1456 = vadd.f32 %v1346, %v1455
    %v1457 = vpop.f32.mrb[0].mxu0
    %v1458 = vadd.f32 %v1350, %v1457
    %1459 = vmatprep.mubr.f32.mxu0 0.0
    %1460 = vmatmul.mubr.f32.gmra.mrb[0].mxu0 %v1363
    %v1461 = vpop.f32.mrb[0].mxu0
    %v1462 = vadd.f32 %v1346, %v1461
    %v1463 = vpop.f32.mrb[0].mxu0
    %v1464 = vadd.f32 %v1350, %v1463
    %1465 = vmatprep.mubr.f32.mxu0 0.0
    %1466 = vmatmul.mubr.f32.gmra.mrb[0].mxu0 %v1366
    %v1467 = vpop.f32.mrb[0].mxu0
    %v1468 = vadd.f32 %v1346, %v1467
    %v1469 = vpop.f32.mrb[0].mxu0
    %v1470 = vadd.f32 %v1350, %v1469
    %1471 = vmatprep.mubr.f32.mxu0 0.0
    %1472 = vmatmul.mubr.f32.gmra.mrb[0].mxu0 %v1369
    %v1473 = vpop.f32.mrb[0].mxu0
    %v1474 = vadd.f32 %v1346, %v1473
    %v1475 = vpop.f32.mrb[0].mxu0
    %v1476 = vadd.f32 %v1350, %v1475
    %1477 = vmatprep.mubr.f32.mxu0 0.0
    %1478 = vmatmul.mubr.f32.gmra.mrb[0].mxu0 %v1372
    %v1479 = vpop.f32.mrb[0].mxu0
    %v1480 = vadd.f32 %v1346, %v1479
    %v1481 = vpop.f32.mrb[0].mxu0
    %v1482 = vadd.f32 %v1350, %v1481
    %1483 = vmatprep.mubr.f32.mxu0 0.0
    %1484 = vmatmul.mubr.f32.gmra.mrb[0].mxu0 %v1375
    %v1485 = vpop.f32.mrb[0].mxu0
    %v1486 = vadd.f32 %v1346, %v1485
    %v1487 = vpop.f32.mrb[0].mxu0
    %v1488 = vadd.f32 %v1350, %v1487
    %1489 = vdwg.mxu0
    %v1490 = vsel %vm431, %v1444, %v1486
    %v1491 = vsel %vm432, %v1446, %v1488
    %1492 = vmatprep.subr.mxu0 %v1325
    %1493 = vmatpush1.msra.mxu0 %v1324
    %1494 = vmatprep.subr.mxu0 %v1327
    %1495 = vmatpush1.msra.mxu0 %v1326
    %1496 = vmatprep.subr.mxu0 %v1329
    %1497 = vmatpush1.msra.mxu0 %v1328
    %1498 = vmatprep.subr.mxu0 %v1331
    %1499 = vmatpush1.msra.mxu0 %v1330
    %1500 = vmatprep.subr.mxu0 %v1333
    %1501 = vmatpush1.msra.mxu0 %v1332
    %1502 = vmatprep.subr.mxu0 %v1335
    %1503 = vmatpush1.msra.mxu0 %v1334
    %1504 = vmatprep.subr.mxu0 %v1337
    %1505 = vmatpush1.msra.mxu0 %v1336
    %1506 = vmatprep.subr.mxu0 %v1339
    %1507 = vmatpush1.msra.mxu0 %v1338
    %1508 = vmatprep.subr.mxu0 0.0
    %1509 = vmatpush1.msra.mxu0 0.0
    %1510 = vmatprep.subr.mxu0 0.0
    %1511 = vmatpush1.msra.mxu0 0.0
    %1512 = vmatprep.subr.mxu0 0.0
    %1513 = vmatpush1.msra.mxu0 0.0
    %1514 = vmatprep.subr.mxu0 0.0
    %1515 = vmatpush1.msra.mxu0 0.0
    %1516 = vmatprep.subr.mxu0 0.0
    %1517 = vmatpush1.msra.mxu0 0.0
    %1518 = vmatprep.subr.mxu0 0.0
    %1519 = vmatpush1.msra.mxu0 0.0
    %1520 = vmatprep.subr.mxu0 0.0
    %1521 = vmatpush1.msra.mxu0 0.0
    %1522 = vmatprep.subr.mxu0 0.0
    %1523 = vmatpush1.msra.mxu0 0.0
    %1524 = vmatprep.subr.mxu0 0.0
    %1525 = vmatpush1.msra.mxu0 0.0
    %1526 = vmatprep.subr.mxu0 0.0
    %1527 = vmatpush1.msra.mxu0 0.0
    %1528 = vmatprep.subr.mxu0 0.0
    %1529 = vmatpush1.msra.mxu0 0.0
    %1530 = vmatprep.subr.mxu0 0.0
    %1531 = vmatpush1.msra.mxu0 0.0
    %1532 = vmatprep.subr.mxu0 0.0
    %1533 = vmatpush1.msra.mxu0 0.0
    %1534 = vmatprep.subr.mxu0 0.0
    %1535 = vmatpush1.msra.mxu0 0.0
    %1536 = vmatprep.subr.mxu0 0.0
    %1537 = vmatpush1.msra.mxu0 0.0
    %1538 = vmatprep.subr.mxu0 0.0
    %1539 = vmatpush1.msra.mxu0 0.0
    %1540 = vmatprep.subr.mxu0 0.0
    %1541 = vmatpush1.msra.mxu0 0.0
    %1542 = vmatprep.subr.mxu0 0.0
    %1543 = vmatpush1.msra.mxu0 0.0
    %1544 = vmatprep.subr.mxu0 0.0
    %1545 = vmatpush1.msra.mxu0 0.0
    %1546 = vmatprep.subr.mxu0 0.0
    %1547 = vmatpush1.msra.mxu0 0.0
    %1548 = vmatprep.subr.mxu0 0.0
    %1549 = vmatpush1.msra.mxu0 0.0
    %1550 = vmatprep.subr.mxu0 0.0
    %1551 = vmatpush1.msra.mxu0 0.0
    %1552 = vmatprep.subr.mxu0 0.0
    %1553 = vmatpush1.msra.mxu0 0.0
    %1554 = vmatprep.subr.mxu0 0.0
    %1555 = vmatpush1.msra.mxu0 0.0
    %1556 = vmatprep.mubr.f32.mxu0 0.0
    %1557 = vmatmul.mubr.f32.gmra.mrb[0].mxu0 %v437
    %v1558 = vpop.f32.mrb[0].mxu0
    %v1559 = vadd.f32 0.0, %v1558
    %v1560 = vpop.f32.mrb[0].mxu0
    %v1561 = vadd.f32 0.0, %v1560
    %1562 = vdwg.mxu0
    %v1563 = vadd.f32 %v1490, %v1559
    %v1564 = vadd.f32 %v1491, %v1561
    %v1565 = vxor.u32 %v1563, 2147483648
    %v1566 = vxor.u32 %v1564, 2147483648
    %v1567 = vmul.f32 %v1565, 1.442695
    %v1568 = vpow.pop %v1567
    %v1569 = vmul.f32 %v1566, 1.442695
    %v1570 = vpow.pop %v1569
    %v1571 = vadd.f32 %v1568, 1.0
    %v1572 = vadd.f32 %v1570, 1.0
    %v1573 = vrcp.pop %v1571
    %v1574 = vmul.f32 1.0, %v1573
    %v1575 = vrcp.pop %v1572
    %v1576 = vmul.f32 1.0, %v1575
    %v1577 = vtanh.pop %v1564
    %v1578 = vmul.f32 %v1574, 0.0
    %1580 = vrot.lane.b32.xlu0 %v1577, 64
    %v1581 = vpop.permute.xlu0 %1580
    %v1583 = vmul.f32 %v1574, %v1581
    %1585 = vrot.lane.b32.xlu0 %v1583, 64
    %v1586 = vpop.permute.xlu0 %1585
    %v1588 = vadd.f32 %v1578, %v1586
    %v1589 = vtanh.pop %v1588
    %1591 = vrot.lane.b32.xlu0 %v1589, 64
    %v1592 = vpop.permute.xlu0 %1591
    %v1594 = vmul.f32 %v1576, %v1592
    %v1595 = vsel %vm431, %v1450, %v1480
    %v1596 = vsel %vm432, %v1452, %v1482
    %v1598 = vsel %vm435, %v1594, 0
    %1600 = vmatprep.subr.mxu0 %v1325
    %1601 = vmatpush1.msra.mxu0 %v1324
    %1602 = vmatprep.subr.mxu0 %v1327
    %1603 = vmatpush1.msra.mxu0 %v1326
    %1604 = vmatprep.subr.mxu0 %v1329
    %1605 = vmatpush1.msra.mxu0 %v1328
    %1606 = vmatprep.subr.mxu0 %v1331
    %1607 = vmatpush1.msra.mxu0 %v1330
    %1608 = vmatprep.subr.mxu0 %v1333
    %1609 = vmatpush1.msra.mxu0 %v1332
    %1610 = vmatprep.subr.mxu0 %v1335
    %1611 = vmatpush1.msra.mxu0 %v1334
    %1612 = vmatprep.subr.mxu0 %v1337
    %1613 = vmatpush1.msra.mxu0 %v1336
    %1614 = vmatprep.subr.mxu0 %v1339
    %1615 = vmatpush1.msra.mxu0 %v1338
    %1616 = vmatprep.subr.mxu0 0.0
    %1617 = vmatpush1.msra.mxu0 0.0
    %1618 = vmatprep.subr.mxu0 0.0
    %1619 = vmatpush1.msra.mxu0 0.0
    %1620 = vmatprep.subr.mxu0 0.0
    %1621 = vmatpush1.msra.mxu0 0.0
    %1622 = vmatprep.subr.mxu0 0.0
    %1623 = vmatpush1.msra.mxu0 0.0
    %1624 = vmatprep.subr.mxu0 0.0
    %1625 = vmatpush1.msra.mxu0 0.0
    %1626 = vmatprep.subr.mxu0 0.0
    %1627 = vmatpush1.msra.mxu0 0.0
    %1628 = vmatprep.subr.mxu0 0.0
    %1629 = vmatpush1.msra.mxu0 0.0
    %1630 = vmatprep.subr.mxu0 0.0
    %1631 = vmatpush1.msra.mxu0 0.0
    %1632 = vmatprep.subr.mxu0 0.0
    %1633 = vmatpush1.msra.mxu0 0.0
    %1634 = vmatprep.subr.mxu0 0.0
    %1635 = vmatpush1.msra.mxu0 0.0
    %1636 = vmatprep.subr.mxu0 0.0
    %1637 = vmatpush1.msra.mxu0 0.0
    %1638 = vmatprep.subr.mxu0 0.0
    %1639 = vmatpush1.msra.mxu0 0.0
    %1640 = vmatprep.subr.mxu0 0.0
    %1641 = vmatpush1.msra.mxu0 0.0
    %1642 = vmatprep.subr.mxu0 0.0
    %1643 = vmatpush1.msra.mxu0 0.0
    %1644 = vmatprep.subr.mxu0 0.0
    %1645 = vmatpush1.msra.mxu0 0.0
    %1646 = vmatprep.subr.mxu0 0.0
    %1647 = vmatpush1.msra.mxu0 0.0
    %1648 = vmatprep.subr.mxu0 0.0
    %1649 = vmatpush1.msra.mxu0 0.0
    %1650 = vmatprep.subr.mxu0 0.0
    %1651 = vmatpush1.msra.mxu0 0.0
    %1652 = vmatprep.subr.mxu0 0.0
    %1653 = vmatpush1.msra.mxu0 0.0
    %1654 = vmatprep.subr.mxu0 0.0
    %1655 = vmatpush1.msra.mxu0 0.0
    %1656 = vmatprep.subr.mxu0 0.0
    %1657 = vmatpush1.msra.mxu0 0.0
    %1658 = vmatprep.subr.mxu0 0.0
    %1659 = vmatpush1.msra.mxu0 0.0
    %1660 = vmatprep.subr.mxu0 0.0
    %1661 = vmatpush1.msra.mxu0 0.0
    %1662 = vmatprep.subr.mxu0 0.0
    %1663 = vmatpush1.msra.mxu0 0.0
    %1664 = vmatprep.mubr.f32.mxu0 0.0
    %1665 = vmatmul.mubr.f32.gmra.mrb[0].mxu0 %v1598
    %v1666 = vpop.f32.mrb[0].mxu0
    %v1667 = vadd.f32 0.0, %v1666
    %v1668 = vpop.f32.mrb[0].mxu0
    %v1669 = vadd.f32 0.0, %v1668
    %1670 = vdwg.mxu0
    %v1671 = vadd.f32 %v1595, %v1667
    %v1672 = vadd.f32 %v1596, %v1669
    %v1673 = vxor.u32 %v1671, 2147483648
    %v1674 = vxor.u32 %v1672, 2147483648
    %v1675 = vmul.f32 %v1673, 1.442695
    %v1676 = vpow.pop %v1675
    %v1677 = vmul.f32 %v1674, 1.442695
    %v1678 = vpow.pop %v1677
    %v1679 = vadd.f32 %v1676, 1.0
    %v1680 = vadd.f32 %v1678, 1.0
    %v1681 = vrcp.pop %v1679
    %v1682 = vmul.f32 1.0, %v1681
    %v1683 = vrcp.pop %v1680
    %v1684 = vmul.f32 1.0, %v1683
    %v1685 = vtanh.pop %v1672
    %v1686 = vmul.f32 %v1682, %v1588
    %1688 = vrot.lane.b32.xlu0 %v1685, 64
    %v1689 = vpop.permute.xlu0 %1688
    %v1691 = vmul.f32 %v1682, %v1689
    %1693 = vrot.lane.b32.xlu0 %v1691, 64
    %v1694 = vpop.permute.xlu0 %1693
    %v1696 = vadd.f32 %v1686, %v1694
    %v1697 = vtanh.pop %v1696
    %1699 = vrot.lane.b32.xlu0 %v1697, 64
    %v1700 = vpop.permute.xlu0 %1699
    %v1702 = vmul.f32 %v1684, %v1700
    %v1703 = vsel %vm431, %v1456, %v1474
    %v1704 = vsel %vm432, %v1458, %v1476
    %v1706 = vsel %vm435, %v1702, 0
    %1708 = vmatprep.subr.mxu0 %v1325
    %1709 = vmatpush1.msra.mxu0 %v1324
    %1710 = vmatprep.subr.mxu0 %v1327
    %1711 = vmatpush1.msra.mxu0 %v1326
    %1712 = vmatprep.subr.mxu0 %v1329
    %1713 = vmatpush1.msra.mxu0 %v1328
    %1714 = vmatprep.subr.mxu0 %v1331
    %1715 = vmatpush1.msra.mxu0 %v1330
    %1716 = vmatprep.subr.mxu0 %v1333
    %1717 = vmatpush1.msra.mxu0 %v1332
    %1718 = vmatprep.subr.mxu0 %v1335
    %1719 = vmatpush1.msra.mxu0 %v1334
    %1720 = vmatprep.subr.mxu0 %v1337
    %1721 = vmatpush1.msra.mxu0 %v1336
    %1722 = vmatprep.subr.mxu0 %v1339
    %1723 = vmatpush1.msra.mxu0 %v1338
    %1724 = vmatprep.subr.mxu0 0.0
    %1725 = vmatpush1.msra.mxu0 0.0
    %1726 = vmatprep.subr.mxu0 0.0
    %1727 = vmatpush1.msra.mxu0 0.0
    %1728 = vmatprep.subr.mxu0 0.0
    %1729 = vmatpush1.msra.mxu0 0.0
    %1730 = vmatprep.subr.mxu0 0.0
    %1731 = vmatpush1.msra.mxu0 0.0
    %1732 = vmatprep.subr.mxu0 0.0
    %1733 = vmatpush1.msra.mxu0 0.0
    %1734 = vmatprep.subr.mxu0 0.0
    %1735 = vmatpush1.msra.mxu0 0.0
    %1736 = vmatprep.subr.mxu0 0.0
    %1737 = vmatpush1.msra.mxu0 0.0
    %1738 = vmatprep.subr.mxu0 0.0
    %1739 = vmatpush1.msra.mxu0 0.0
    %1740 = vmatprep.subr.mxu0 0.0
    %1741 = vmatpush1.msra.mxu0 0.0
    %1742 = vmatprep.subr.mxu0 0.0
    %1743 = vmatpush1.msra.mxu0 0.0
    %1744 = vmatprep.subr.mxu0 0.0
    %1745 = vmatpush1.msra.mxu0 0.0
    %1746 = vmatprep.subr.mxu0 0.0
    %1747 = vmatpush1.msra.mxu0 0.0
    %1748 = vmatprep.subr.mxu0 0.0
    %1749 = vmatpush1.msra.mxu0 0.0
    %1750 = vmatprep.subr.mxu0 0.0
    %1751 = vmatpush1.msra.mxu0 0.0
    %1752 = vmatprep.subr.mxu0 0.0
    %1753 = vmatpush1.msra.mxu0 0.0
    %1754 = vmatprep.subr.mxu0 0.0
    %1755 = vmatpush1.msra.mxu0 0.0
    %1756 = vmatprep.subr.mxu0 0.0
    %1757 = vmatpush1.msra.mxu0 0.0
    %1758 = vmatprep.subr.mxu0 0.0
    %1759 = vmatpush1.msra.mxu0 0.0
    %1760 = vmatprep.subr.mxu0 0.0
    %1761 = vmatpush1.msra.mxu0 0.0
    %1762 = vmatprep.subr.mxu0 0.0
    %1763 = vmatpush1.msra.mxu0 0.0
    %1764 = vmatprep.subr.mxu0 0.0
    %1765 = vmatpush1.msra.mxu0 0.0
    %1766 = vmatprep.subr.mxu0 0.0
    %1767 = vmatpush1.msra.mxu0 0.0
    %1768 = vmatprep.subr.mxu0 0.0
    %1769 = vmatpush1.msra.mxu0 0.0
    %1770 = vmatprep.subr.mxu0 0.0
    %1771 = vmatpush1.msra.mxu0 0.0
    %1772 = vmatprep.mubr.f32.mxu0 0.0
    %1773 = vmatmul.mubr.f32.gmra.mrb[0].mxu0 %v1706
    %v1774 = vpop.f32.mrb[0].mxu0
    %v1775 = vadd.f32 0.0, %v1774
    %v1776 = vpop.f32.mrb[0].mxu0
    %v1777 = vadd.f32 0.0, %v1776
    %1778 = vdwg.mxu0
    %v1779 = vadd.f32 %v1703, %v1775
    %v1780 = vadd.f32 %v1704, %v1777
    %v1781 = vxor.u32 %v1779, 2147483648
    %v1782 = vxor.u32 %v1780, 2147483648
    %v1783 = vmul.f32 %v1781, 1.442695
    %v1784 = vpow.pop %v1783
    %v1785 = vmul.f32 %v1782, 1.442695
    %v1786 = vpow.pop %v1785
    %v1787 = vadd.f32 %v1784, 1.0
    %v1788 = vadd.f32 %v1786, 1.0
    %v1789 = vrcp.pop %v1787
    %v1790 = vmul.f32 1.0, %v1789
    %v1791 = vrcp.pop %v1788
    %v1792 = vmul.f32 1.0, %v1791
    %v1793 = vtanh.pop %v1780
    %v1794 = vmul.f32 %v1790, %v1696
    %1796 = vrot.lane.b32.xlu0 %v1793, 64
    %v1797 = vpop.permute.xlu0 %1796
    %v1799 = vmul.f32 %v1790, %v1797
    %1801 = vrot.lane.b32.xlu0 %v1799, 64
    %v1802 = vpop.permute.xlu0 %1801
    %v1804 = vadd.f32 %v1794, %v1802
    %v1805 = vtanh.pop %v1804
    %1807 = vrot.lane.b32.xlu0 %v1805, 64
    %v1808 = vpop.permute.xlu0 %1807
    %v1810 = vmul.f32 %v1792, %v1808
    %v1811 = vsel %vm431, %v1462, %v1468
    %v1812 = vsel %vm432, %v1464, %v1470
    %v1814 = vsel %vm435, %v1810, 0
    %1816 = vmatprep.subr.mxu0 %v1325
    %1817 = vmatpush1.msra.mxu0 %v1324
    %1818 = vmatprep.subr.mxu0 %v1327
    %1819 = vmatpush1.msra.mxu0 %v1326
    %1820 = vmatprep.subr.mxu0 %v1329
    %1821 = vmatpush1.msra.mxu0 %v1328
    %1822 = vmatprep.subr.mxu0 %v1331
    %1823 = vmatpush1.msra.mxu0 %v1330
    %1824 = vmatprep.subr.mxu0 %v1333
    %1825 = vmatpush1.msra.mxu0 %v1332
    %1826 = vmatprep.subr.mxu0 %v1335
    %1827 = vmatpush1.msra.mxu0 %v1334
    %1828 = vmatprep.subr.mxu0 %v1337
    %1829 = vmatpush1.msra.mxu0 %v1336
    %1830 = vmatprep.subr.mxu0 %v1339
    %1831 = vmatpush1.msra.mxu0 %v1338
    %1832 = vmatprep.subr.mxu0 0.0
    %1833 = vmatpush1.msra.mxu0 0.0
    %1834 = vmatprep.subr.mxu0 0.0
    %1835 = vmatpush1.msra.mxu0 0.0
    %1836 = vmatprep.subr.mxu0 0.0
    %1837 = vmatpush1.msra.mxu0 0.0
    %1838 = vmatprep.subr.mxu0 0.0
    %1839 = vmatpush1.msra.mxu0 0.0
    %1840 = vmatprep.subr.mxu0 0.0
    %1841 = vmatpush1.msra.mxu0 0.0
    %1842 = vmatprep.subr.mxu0 0.0
    %1843 = vmatpush1.msra.mxu0 0.0
    %1844 = vmatprep.subr.mxu0 0.0
    %1845 = vmatpush1.msra.mxu0 0.0
    %1846 = vmatprep.subr.mxu0 0.0
    %1847 = vmatpush1.msra.mxu0 0.0
    %1848 = vmatprep.subr.mxu0 0.0
    %1849 = vmatpush1.msra.mxu0 0.0
    %1850 = vmatprep.subr.mxu0 0.0
    %1851 = vmatpush1.msra.mxu0 0.0
    %1852 = vmatprep.subr.mxu0 0.0
    %1853 = vmatpush1.msra.mxu0 0.0
    %1854 = vmatprep.subr.mxu0 0.0
    %1855 = vmatpush1.msra.mxu0 0.0
    %1856 = vmatprep.subr.mxu0 0.0
    %1857 = vmatpush1.msra.mxu0 0.0
    %1858 = vmatprep.subr.mxu0 0.0
    %1859 = vmatpush1.msra.mxu0 0.0
    %1860 = vmatprep.subr.mxu0 0.0
    %1861 = vmatpush1.msra.mxu0 0.0
    %1862 = vmatprep.subr.mxu0 0.0
    %1863 = vmatpush1.msra.mxu0 0.0
    %1864 = vmatprep.subr.mxu0 0.0
    %1865 = vmatpush1.msra.mxu0 0.0
    %1866 = vmatprep.subr.mxu0 0.0
    %1867 = vmatpush1.msra.mxu0 0.0
    %1868 = vmatprep.subr.mxu0 0.0
    %1869 = vmatpush1.msra.mxu0 0.0
    %1870 = vmatprep.subr.mxu0 0.0
    %1871 = vmatpush1.msra.mxu0 0.0
    %1872 = vmatprep.subr.mxu0 0.0
    %1873 = vmatpush1.msra.mxu0 0.0
    %1874 = vmatprep.subr.mxu0 0.0
    %1875 = vmatpush1.msra.mxu0 0.0
    %1876 = vmatprep.subr.mxu0 0.0
    %1877 = vmatpush1.msra.mxu0 0.0
    %1878 = vmatprep.subr.mxu0 0.0
    %1879 = vmatpush1.msra.mxu0 0.0
    %1880 = vmatprep.mubr.f32.mxu0 0.0
    %1881 = vmatmul.mubr.f32.gmra.mrb[0].mxu0 %v1814
    %v1882 = vpop.f32.mrb[0].mxu0
    %v1883 = vadd.f32 0.0, %v1882
    %v1884 = vpop.f32.mrb[0].mxu0
    %v1885 = vadd.f32 0.0, %v1884
    %1886 = vdwg.mxu0
    %v1887 = vadd.f32 %v1811, %v1883
    %v1888 = vadd.f32 %v1812, %v1885
    %v1889 = vxor.u32 %v1887, 2147483648
    %v1890 = vxor.u32 %v1888, 2147483648
    %v1891 = vmul.f32 %v1889, 1.442695
    %v1892 = vpow.pop %v1891
    %v1893 = vmul.f32 %v1890, 1.442695
    %v1894 = vpow.pop %v1893
    %v1895 = vadd.f32 %v1892, 1.0
    %v1896 = vadd.f32 %v1894, 1.0
    %v1897 = vrcp.pop %v1895
    %v1898 = vmul.f32 1.0, %v1897
    %v1899 = vrcp.pop %v1896
    %v1900 = vmul.f32 1.0, %v1899
    %v1901 = vtanh.pop %v1888
    %v1902 = vmul.f32 %v1898, %v1804
    %1904 = vrot.lane.b32.xlu0 %v1901, 64
    %v1905 = vpop.permute.xlu0 %1904
    %v1907 = vmul.f32 %v1898, %v1905
    %1909 = vrot.lane.b32.xlu0 %v1907, 64
    %v1910 = vpop.permute.xlu0 %1909
    %v1912 = vadd.f32 %v1902, %v1910
    %v1913 = vtanh.pop %v1912
    %1915 = vrot.lane.b32.xlu0 %v1913, 64
    %v1916 = vpop.permute.xlu0 %1915
    %v1918 = vmul.f32 %v1900, %v1916
    %v1919 = vsel %vm431, %v1468, %v1462
    %v1920 = vsel %vm432, %v1470, %v1464
    %v1922 = vsel %vm435, %v1918, 0
    %1924 = vmatprep.subr.mxu0 %v1325
    %1925 = vmatpush1.msra.mxu0 %v1324
    %1926 = vmatprep.subr.mxu0 %v1327
    %1927 = vmatpush1.msra.mxu0 %v1326
    %1928 = vmatprep.subr.mxu0 %v1329
    %1929 = vmatpush1.msra.mxu0 %v1328
    %1930 = vmatprep.subr.mxu0 %v1331
    %1931 = vmatpush1.msra.mxu0 %v1330
    %1932 = vmatprep.subr.mxu0 %v1333
    %1933 = vmatpush1.msra.mxu0 %v1332
    %1934 = vmatprep.subr.mxu0 %v1335
    %1935 = vmatpush1.msra.mxu0 %v1334
    %1936 = vmatprep.subr.mxu0 %v1337
    %1937 = vmatpush1.msra.mxu0 %v1336
    %1938 = vmatprep.subr.mxu0 %v1339
    %1939 = vmatpush1.msra.mxu0 %v1338
    %1940 = vmatprep.subr.mxu0 0.0
    %1941 = vmatpush1.msra.mxu0 0.0
    %1942 = vmatprep.subr.mxu0 0.0
    %1943 = vmatpush1.msra.mxu0 0.0
    %1944 = vmatprep.subr.mxu0 0.0
    %1945 = vmatpush1.msra.mxu0 0.0
    %1946 = vmatprep.subr.mxu0 0.0
    %1947 = vmatpush1.msra.mxu0 0.0
    %1948 = vmatprep.subr.mxu0 0.0
    %1949 = vmatpush1.msra.mxu0 0.0
    %1950 = vmatprep.subr.mxu0 0.0
    %1951 = vmatpush1.msra.mxu0 0.0
    %1952 = vmatprep.subr.mxu0 0.0
    %1953 = vmatpush1.msra.mxu0 0.0
    %1954 = vmatprep.subr.mxu0 0.0
    %1955 = vmatpush1.msra.mxu0 0.0
    %1956 = vmatprep.subr.mxu0 0.0
    %1957 = vmatpush1.msra.mxu0 0.0
    %1958 = vmatprep.subr.mxu0 0.0
    %1959 = vmatpush1.msra.mxu0 0.0
    %1960 = vmatprep.subr.mxu0 0.0
    %1961 = vmatpush1.msra.mxu0 0.0
    %1962 = vmatprep.subr.mxu0 0.0
    %1963 = vmatpush1.msra.mxu0 0.0
    %1964 = vmatprep.subr.mxu0 0.0
    %1965 = vmatpush1.msra.mxu0 0.0
    %1966 = vmatprep.subr.mxu0 0.0
    %1967 = vmatpush1.msra.mxu0 0.0
    %1968 = vmatprep.subr.mxu0 0.0
    %1969 = vmatpush1.msra.mxu0 0.0
    %1970 = vmatprep.subr.mxu0 0.0
    %1971 = vmatpush1.msra.mxu0 0.0
    %1972 = vmatprep.subr.mxu0 0.0
    %1973 = vmatpush1.msra.mxu0 0.0
    %1974 = vmatprep.subr.mxu0 0.0
    %1975 = vmatpush1.msra.mxu0 0.0
    %1976 = vmatprep.subr.mxu0 0.0
    %1977 = vmatpush1.msra.mxu0 0.0
    %1978 = vmatprep.subr.mxu0 0.0
    %1979 = vmatpush1.msra.mxu0 0.0
    %1980 = vmatprep.subr.mxu0 0.0
    %1981 = vmatpush1.msra.mxu0 0.0
    %1982 = vmatprep.subr.mxu0 0.0
    %1983 = vmatpush1.msra.mxu0 0.0
    %1984 = vmatprep.subr.mxu0 0.0
    %1985 = vmatpush1.msra.mxu0 0.0
    %1986 = vmatprep.subr.mxu0 0.0
    %1987 = vmatpush1.msra.mxu0 0.0
    %1988 = vmatprep.mubr.f32.mxu0 0.0
    %1989 = vmatmul.mubr.f32.gmra.mrb[0].mxu0 %v1922
    %v1990 = vpop.f32.mrb[0].mxu0
    %v1991 = vadd.f32 0.0, %v1990
    %v1992 = vpop.f32.mrb[0].mxu0
    %v1993 = vadd.f32 0.0, %v1992
    %1994 = vdwg.mxu0
    %v1995 = vadd.f32 %v1919, %v1991
    %v1996 = vadd.f32 %v1920, %v1993
    %v1997 = vxor.u32 %v1995, 2147483648
    %v1998 = vxor.u32 %v1996, 2147483648
    %v1999 = vmul.f32 %v1997, 1.442695
    %v2000 = vpow.pop %v1999
    %v2001 = vmul.f32 %v1998, 1.442695
    %v2002 = vpow.pop %v2001
    %v2003 = vadd.f32 %v2000, 1.0
    %v2004 = vadd.f32 %v2002, 1.0
    %v2005 = vrcp.pop %v2003
    %v2006 = vmul.f32 1.0, %v2005
    %v2007 = vrcp.pop %v2004
    %v2008 = vmul.f32 1.0, %v2007
    %v2009 = vtanh.pop %v1996
    %v2010 = vmul.f32 %v2006, %v1912
    %2012 = vrot.lane.b32.xlu0 %v2009, 64
    %v2013 = vpop.permute.xlu0 %2012
    %v2015 = vmul.f32 %v2006, %v2013
    %2017 = vrot.lane.b32.xlu0 %v2015, 64
    %v2018 = vpop.permute.xlu0 %2017
    %v2020 = vadd.f32 %v2010, %v2018
    %v2021 = vtanh.pop %v2020
    %2023 = vrot.lane.b32.xlu0 %v2021, 64
    %v2024 = vpop.permute.xlu0 %2023
    %v2026 = vmul.f32 %v2008, %v2024
    %v2027 = vsel %vm431, %v1474, %v1456
    %v2028 = vsel %vm432, %v1476, %v1458
    %v2030 = vsel %vm435, %v2026, 0
    %2032 = vmatprep.subr.mxu0 %v1325
    %2033 = vmatpush1.msra.mxu0 %v1324
    %2034 = vmatprep.subr.mxu0 %v1327
    %2035 = vmatpush1.msra.mxu0 %v1326
    %2036 = vmatprep.subr.mxu0 %v1329
    %2037 = vmatpush1.msra.mxu0 %v1328
    %2038 = vmatprep.subr.mxu0 %v1331
    %2039 = vmatpush1.msra.mxu0 %v1330
    %2040 = vmatprep.subr.mxu0 %v1333
    %2041 = vmatpush1.msra.mxu0 %v1332
    %2042 = vmatprep.subr.mxu0 %v1335
    %2043 = vmatpush1.msra.mxu0 %v1334
    %2044 = vmatprep.subr.mxu0 %v1337
    %2045 = vmatpush1.msra.mxu0 %v1336
    %2046 = vmatprep.subr.mxu0 %v1339
    %2047 = vmatpush1.msra.mxu0 %v1338
    %2048 = vmatprep.subr.mxu0 0.0
    %2049 = vmatpush1.msra.mxu0 0.0
    %2050 = vmatprep.subr.mxu0 0.0
    %2051 = vmatpush1.msra.mxu0 0.0
    %2052 = vmatprep.subr.mxu0 0.0
    %2053 = vmatpush1.msra.mxu0 0.0
    %2054 = vmatprep.subr.mxu0 0.0
    %2055 = vmatpush1.msra.mxu0 0.0
    %2056 = vmatprep.subr.mxu0 0.0
    %2057 = vmatpush1.msra.mxu0 0.0
    %2058 = vmatprep.subr.mxu0 0.0
    %2059 = vmatpush1.msra.mxu0 0.0
    %2060 = vmatprep.subr.mxu0 0.0
    %2061 = vmatpush1.msra.mxu0 0.0
    %2062 = vmatprep.subr.mxu0 0.0
    %2063 = vmatpush1.msra.mxu0 0.0
    %2064 = vmatprep.subr.mxu0 0.0
    %2065 = vmatpush1.msra.mxu0 0.0
    %2066 = vmatprep.subr.mxu0 0.0
    %2067 = vmatpush1.msra.mxu0 0.0
    %2068 = vmatprep.subr.mxu0 0.0
    %2069 = vmatpush1.msra.mxu0 0.0
    %2070 = vmatprep.subr.mxu0 0.0
    %2071 = vmatpush1.msra.mxu0 0.0
    %2072 = vmatprep.subr.mxu0 0.0
    %2073 = vmatpush1.msra.mxu0 0.0
    %2074 = vmatprep.subr.mxu0 0.0
    %2075 = vmatpush1.msra.mxu0 0.0
    %2076 = vmatprep.subr.mxu0 0.0
    %2077 = vmatpush1.msra.mxu0 0.0
    %2078 = vmatprep.subr.mxu0 0.0
    %2079 = vmatpush1.msra.mxu0 0.0
    %2080 = vmatprep.subr.mxu0 0.0
    %2081 = vmatpush1.msra.mxu0 0.0
    %2082 = vmatprep.subr.mxu0 0.0
    %2083 = vmatpush1.msra.mxu0 0.0
    %2084 = vmatprep.subr.mxu0 0.0
    %2085 = vmatpush1.msra.mxu0 0.0
    %2086 = vmatprep.subr.mxu0 0.0
    %2087 = vmatpush1.msra.mxu0 0.0
    %2088 = vmatprep.subr.mxu0 0.0
    %2089 = vmatpush1.msra.mxu0 0.0
    %2090 = vmatprep.subr.mxu0 0.0
    %2091 = vmatpush1.msra.mxu0 0.0
    %2092 = vmatprep.subr.mxu0 0.0
    %2093 = vmatpush1.msra.mxu0 0.0
    %2094 = vmatprep.subr.mxu0 0.0
    %2095 = vmatpush1.msra.mxu0 0.0
    %2096 = vmatprep.mubr.f32.mxu0 0.0
    %2097 = vmatmul.mubr.f32.gmra.mrb[0].mxu0 %v2030
    %v2098 = vpop.f32.mrb[0].mxu0
    %v2099 = vadd.f32 0.0, %v2098
    %v2100 = vpop.f32.mrb[0].mxu0
    %v2101 = vadd.f32 0.0, %v2100
    %2102 = vdwg.mxu0
    %v2103 = vadd.f32 %v2027, %v2099
    %v2104 = vadd.f32 %v2028, %v2101
    %v2105 = vxor.u32 %v2103, 2147483648
    %v2106 = vxor.u32 %v2104, 2147483648
    %v2107 = vmul.f32 %v2105, 1.442695
    %v2108 = vpow.pop %v2107
    %v2109 = vmul.f32 %v2106, 1.442695
    %v2110 = vpow.pop %v2109
    %v2111 = vadd.f32 %v2108, 1.0
    %v2112 = vadd.f32 %v2110, 1.0
    %v2113 = vrcp.pop %v2111
    %v2114 = vmul.f32 1.0, %v2113
    %v2115 = vrcp.pop %v2112
    %v2116 = vmul.f32 1.0, %v2115
    %v2117 = vtanh.pop %v2104
    %v2118 = vmul.f32 %v2114, %v2020
    %2120 = vrot.lane.b32.xlu0 %v2117, 64
    %v2121 = vpop.permute.xlu0 %2120
    %v2123 = vmul.f32 %v2114, %v2121
    %2125 = vrot.lane.b32.xlu0 %v2123, 64
    %v2126 = vpop.permute.xlu0 %2125
    %v2128 = vadd.f32 %v2118, %v2126
    %v2129 = vtanh.pop %v2128
    %2131 = vrot.lane.b32.xlu0 %v2129, 64
    %v2132 = vpop.permute.xlu0 %2131
    %v2134 = vmul.f32 %v2116, %v2132
    %v2135 = vsel %vm431, %v1480, %v1450
    %v2136 = vsel %vm432, %v1482, %v1452
    %v2138 = vsel %vm435, %v2134, 0
    %2140 = vmatprep.subr.mxu0 %v1325
    %2141 = vmatpush1.msra.mxu0 %v1324
    %2142 = vmatprep.subr.mxu0 %v1327
    %2143 = vmatpush1.msra.mxu0 %v1326
    %2144 = vmatprep.subr.mxu0 %v1329
    %2145 = vmatpush1.msra.mxu0 %v1328
    %2146 = vmatprep.subr.mxu0 %v1331
    %2147 = vmatpush1.msra.mxu0 %v1330
    %2148 = vmatprep.subr.mxu0 %v1333
    %2149 = vmatpush1.msra.mxu0 %v1332
    %2150 = vmatprep.subr.mxu0 %v1335
    %2151 = vmatpush1.msra.mxu0 %v1334
    %2152 = vmatprep.subr.mxu0 %v1337
    %2153 = vmatpush1.msra.mxu0 %v1336
    %2154 = vmatprep.subr.mxu0 %v1339
    %2155 = vmatpush1.msra.mxu0 %v1338
    %2156 = vmatprep.subr.mxu0 0.0
    %2157 = vmatpush1.msra.mxu0 0.0
    %2158 = vmatprep.subr.mxu0 0.0
    %2159 = vmatpush1.msra.mxu0 0.0
    %2160 = vmatprep.subr.mxu0 0.0
    %2161 = vmatpush1.msra.mxu0 0.0
    %2162 = vmatprep.subr.mxu0 0.0
    %2163 = vmatpush1.msra.mxu0 0.0
    %2164 = vmatprep.subr.mxu0 0.0
    %2165 = vmatpush1.msra.mxu0 0.0
    %2166 = vmatprep.subr.mxu0 0.0
    %2167 = vmatpush1.msra.mxu0 0.0
    %2168 = vmatprep.subr.mxu0 0.0
    %2169 = vmatpush1.msra.mxu0 0.0
    %2170 = vmatprep.subr.mxu0 0.0
    %2171 = vmatpush1.msra.mxu0 0.0
    %2172 = vmatprep.subr.mxu0 0.0
    %2173 = vmatpush1.msra.mxu0 0.0
    %2174 = vmatprep.subr.mxu0 0.0
    %2175 = vmatpush1.msra.mxu0 0.0
    %2176 = vmatprep.subr.mxu0 0.0
    %2177 = vmatpush1.msra.mxu0 0.0
    %2178 = vmatprep.subr.mxu0 0.0
    %2179 = vmatpush1.msra.mxu0 0.0
    %2180 = vmatprep.subr.mxu0 0.0
    %2181 = vmatpush1.msra.mxu0 0.0
    %2182 = vmatprep.subr.mxu0 0.0
    %2183 = vmatpush1.msra.mxu0 0.0
    %2184 = vmatprep.subr.mxu0 0.0
    %2185 = vmatpush1.msra.mxu0 0.0
    %2186 = vmatprep.subr.mxu0 0.0
    %2187 = vmatpush1.msra.mxu0 0.0
    %2188 = vmatprep.subr.mxu0 0.0
    %2189 = vmatpush1.msra.mxu0 0.0
    %2190 = vmatprep.subr.mxu0 0.0
    %2191 = vmatpush1.msra.mxu0 0.0
    %2192 = vmatprep.subr.mxu0 0.0
    %2193 = vmatpush1.msra.mxu0 0.0
    %2194 = vmatprep.subr.mxu0 0.0
    %2195 = vmatpush1.msra.mxu0 0.0
    %2196 = vmatprep.subr.mxu0 0.0
    %2197 = vmatpush1.msra.mxu0 0.0
    %2198 = vmatprep.subr.mxu0 0.0
    %2199 = vmatpush1.msra.mxu0 0.0
    %2200 = vmatprep.subr.mxu0 0.0
    %2201 = vmatpush1.msra.mxu0 0.0
    %2202 = vmatprep.subr.mxu0 0.0
    %2203 = vmatpush1.msra.mxu0 0.0
    %2204 = vmatprep.mubr.f32.mxu0 0.0
    %2205 = vmatmul.mubr.f32.gmra.mrb[0].mxu0 %v2138
    %v2206 = vpop.f32.mrb[0].mxu0
    %v2207 = vadd.f32 0.0, %v2206
    %v2208 = vpop.f32.mrb[0].mxu0
    %v2209 = vadd.f32 0.0, %v2208
    %2210 = vdwg.mxu0
    %v2211 = vadd.f32 %v2135, %v2207
    %v2212 = vadd.f32 %v2136, %v2209
    %v2213 = vxor.u32 %v2211, 2147483648
    %v2214 = vxor.u32 %v2212, 2147483648
    %v2215 = vmul.f32 %v2213, 1.442695
    %v2216 = vpow.pop %v2215
    %v2217 = vmul.f32 %v2214, 1.442695
    %v2218 = vpow.pop %v2217
    %v2219 = vadd.f32 %v2216, 1.0
    %v2220 = vadd.f32 %v2218, 1.0
    %v2221 = vrcp.pop %v2219
    %v2222 = vmul.f32 1.0, %v2221
    %v2223 = vrcp.pop %v2220
    %v2224 = vmul.f32 1.0, %v2223
    %v2225 = vtanh.pop %v2212
    %v2226 = vmul.f32 %v2222, %v2128
    %2228 = vrot.lane.b32.xlu0 %v2225, 64
    %v2229 = vpop.permute.xlu0 %2228
    %v2231 = vmul.f32 %v2222, %v2229
    %2233 = vrot.lane.b32.xlu0 %v2231, 64
    %v2234 = vpop.permute.xlu0 %2233
    %v2236 = vadd.f32 %v2226, %v2234
    %v2237 = vtanh.pop %v2236
    %2239 = vrot.lane.b32.xlu0 %v2237, 64
    %v2240 = vpop.permute.xlu0 %2239
    %v2242 = vmul.f32 %v2224, %v2240
    %v2243 = vsel %vm431, %v1486, %v1444
    %v2244 = vsel %vm432, %v1488, %v1446
    %v2246 = vsel %vm435, %v2242, 0
    %2248 = vmatprep.subr.mxu0 %v1325
    %2249 = vmatpush1.msra.mxu0 %v1324
    %2250 = vmatprep.subr.mxu0 %v1327
    %2251 = vmatpush1.msra.mxu0 %v1326
    %2252 = vmatprep.subr.mxu0 %v1329
    %2253 = vmatpush1.msra.mxu0 %v1328
    %2254 = vmatprep.subr.mxu0 %v1331
    %2255 = vmatpush1.msra.mxu0 %v1330
    %2256 = vmatprep.subr.mxu0 %v1333
    %2257 = vmatpush1.msra.mxu0 %v1332
    %2258 = vmatprep.subr.mxu0 %v1335
    %2259 = vmatpush1.msra.mxu0 %v1334
    %2260 = vmatprep.subr.mxu0 %v1337
    %2261 = vmatpush1.msra.mxu0 %v1336
    %2262 = vmatprep.subr.mxu0 %v1339
    %2263 = vmatpush1.msra.mxu0 %v1338
    %2264 = vmatprep.subr.mxu0 0.0
    %2265 = vmatpush1.msra.mxu0 0.0
    %2266 = vmatprep.subr.mxu0 0.0
    %2267 = vmatpush1.msra.mxu0 0.0
    %2268 = vmatprep.subr.mxu0 0.0
    %2269 = vmatpush1.msra.mxu0 0.0
    %2270 = vmatprep.subr.mxu0 0.0
    %2271 = vmatpush1.msra.mxu0 0.0
    %2272 = vmatprep.subr.mxu0 0.0
    %2273 = vmatpush1.msra.mxu0 0.0
    %2274 = vmatprep.subr.mxu0 0.0
    %2275 = vmatpush1.msra.mxu0 0.0
    %2276 = vmatprep.subr.mxu0 0.0
    %2277 = vmatpush1.msra.mxu0 0.0
    %2278 = vmatprep.subr.mxu0 0.0
    %2279 = vmatpush1.msra.mxu0 0.0
    %2280 = vmatprep.subr.mxu0 0.0
    %2281 = vmatpush1.msra.mxu0 0.0
    %2282 = vmatprep.subr.mxu0 0.0
    %2283 = vmatpush1.msra.mxu0 0.0
    %2284 = vmatprep.subr.mxu0 0.0
    %2285 = vmatpush1.msra.mxu0 0.0
    %2286 = vmatprep.subr.mxu0 0.0
    %2287 = vmatpush1.msra.mxu0 0.0
    %2288 = vmatprep.subr.mxu0 0.0
    %2289 = vmatpush1.msra.mxu0 0.0
    %2290 = vmatprep.subr.mxu0 0.0
    %2291 = vmatpush1.msra.mxu0 0.0
    %2292 = vmatprep.subr.mxu0 0.0
    %2293 = vmatpush1.msra.mxu0 0.0
    %2294 = vmatprep.subr.mxu0 0.0
    %2295 = vmatpush1.msra.mxu0 0.0
    %2296 = vmatprep.subr.mxu0 0.0
    %2297 = vmatpush1.msra.mxu0 0.0
    %2298 = vmatprep.subr.mxu0 0.0
    %2299 = vmatpush1.msra.mxu0 0.0
    %2300 = vmatprep.subr.mxu0 0.0
    %2301 = vmatpush1.msra.mxu0 0.0
    %2302 = vmatprep.subr.mxu0 0.0
    %2303 = vmatpush1.msra.mxu0 0.0
    %2304 = vmatprep.subr.mxu0 0.0
    %2305 = vmatpush1.msra.mxu0 0.0
    %2306 = vmatprep.subr.mxu0 0.0
    %2307 = vmatpush1.msra.mxu0 0.0
    %2308 = vmatprep.subr.mxu0 0.0
    %2309 = vmatpush1.msra.mxu0 0.0
    %2310 = vmatprep.subr.mxu0 0.0
    %2311 = vmatpush1.msra.mxu0 0.0
    %2312 = vmatprep.mubr.f32.mxu0 0.0
    %2313 = vmatmul.mubr.f32.gmra.mrb[0].mxu0 %v2246
    %v2314 = vpop.f32.mrb[0].mxu0
    %v2315 = vadd.f32 0.0, %v2314
    %v2316 = vpop.f32.mrb[0].mxu0
    %v2317 = vadd.f32 0.0, %v2316
    %2318 = vdwg.mxu0
    %v2319 = vadd.f32 %v2243, %v2315
    %v2320 = vadd.f32 %v2244, %v2317
    %v2321 = vxor.u32 %v2319, 2147483648
    %v2322 = vxor.u32 %v2320, 2147483648
    %v2323 = vmul.f32 %v2321, 1.442695
    %v2324 = vpow.pop %v2323
    %v2325 = vmul.f32 %v2322, 1.442695
    %v2326 = vpow.pop %v2325
    %v2327 = vadd.f32 %v2324, 1.0
    %v2328 = vadd.f32 %v2326, 1.0
    %v2329 = vrcp.pop %v2327
    %v2330 = vmul.f32 1.0, %v2329
    %v2331 = vrcp.pop %v2328
    %v2332 = vmul.f32 1.0, %v2331
    %v2333 = vtanh.pop %v2320
    %v2334 = vmul.f32 %v2330, %v2236
    %2336 = vrot.lane.b32.xlu0 %v2333, 64
    %v2337 = vpop.permute.xlu0 %2336
    %v2339 = vmul.f32 %v2330, %v2337
    %2341 = vrot.lane.b32.xlu0 %v2339, 64
    %v2342 = vpop.permute.xlu0 %2341
    %v2344 = vadd.f32 %v2334, %v2342
    %v2345 = vtanh.pop %v2344
    %2347 = vrot.lane.b32.xlu0 %v2345, 64
    %v2348 = vpop.permute.xlu0 %2347
    %v2350 = vmul.f32 %v2332, %v2348
    %v2351 = vld [vmem:[#allocation2 + $0x1e0] sm:$0xff]
    %v2352 = vld [vmem:[#allocation2 + $0x1e8] sm:$0xff]
    %v2353 = vld [vmem:[#allocation2 + $0x1f0] sm:$0xff]
    %v2354 = vld [vmem:[#allocation2 + $0x1f8] sm:$0xff]
    %v2355 = vld [vmem:[#allocation2 + $0x200] sm:$0xff]
    %v2356 = vld [vmem:[#allocation2 + $0x208] sm:$0xff]
    %v2357 = vld [vmem:[#allocation2 + $0x210] sm:$0xff]
    %v2358 = vld [vmem:[#allocation2 + $0x218] sm:$0xff]
    %v2359 = vld [vmem:[#allocation2 + $0x220] sm:$0xff]
    %v2360 = vld [vmem:[#allocation2 + $0x228] sm:$0xff]
    %v2361 = vld [vmem:[#allocation2 + $0x230] sm:$0xff]
    %v2362 = vld [vmem:[#allocation2 + $0x238] sm:$0xff]
    %v2363 = vld [vmem:[#allocation2 + $0x240] sm:$0xff]
    %v2364 = vld [vmem:[#allocation2 + $0x248] sm:$0xff]
    %v2365 = vld [vmem:[#allocation2 + $0x250] sm:$0xff]
    %v2366 = vld [vmem:[#allocation2 + $0x258] sm:$0xff]
    %s2367 = scalar_lea.vmem [#allocation2], 608
    %v2368 = vld [vmem:[%s2367] ss:$8 sm:$0x3]
    %v2370 = vsel %vm435, %v2350, 0
    %2372 = vmatprep.subr.mxu0 %v2352
    %2373 = vmatpush1.msra.mxu0 %v2351
    %2374 = vmatprep.subr.mxu0 %v2354
    %2375 = vmatpush1.msra.mxu0 %v2353
    %2376 = vmatprep.subr.mxu0 %v2356
    %2377 = vmatpush1.msra.mxu0 %v2355
    %2378 = vmatprep.subr.mxu0 %v2358
    %2379 = vmatpush1.msra.mxu0 %v2357
    %2380 = vmatprep.subr.mxu0 %v2360
    %2381 = vmatpush1.msra.mxu0 %v2359
    %2382 = vmatprep.subr.mxu0 %v2362
    %2383 = vmatpush1.msra.mxu0 %v2361
    %2384 = vmatprep.subr.mxu0 %v2364
    %2385 = vmatpush1.msra.mxu0 %v2363
    %2386 = vmatprep.subr.mxu0 %v2366
    %2387 = vmatpush1.msra.mxu0 %v2365
    %2388 = vmatprep.subr.mxu0 0.0
    %2389 = vmatpush1.msra.mxu0 0.0
    %2390 = vmatprep.subr.mxu0 0.0
    %2391 = vmatpush1.msra.mxu0 0.0
    %2392 = vmatprep.subr.mxu0 0.0
    %2393 = vmatpush1.msra.mxu0 0.0
    %2394 = vmatprep.subr.mxu0 0.0
    %2395 = vmatpush1.msra.mxu0 0.0
    %2396 = vmatprep.subr.mxu0 0.0
    %2397 = vmatpush1.msra.mxu0 0.0
    %2398 = vmatprep.subr.mxu0 0.0
    %2399 = vmatpush1.msra.mxu0 0.0
    %2400 = vmatprep.subr.mxu0 0.0
    %2401 = vmatpush1.msra.mxu0 0.0
    %2402 = vmatprep.subr.mxu0 0.0
    %2403 = vmatpush1.msra.mxu0 0.0
    %2404 = vmatprep.subr.mxu0 0.0
    %2405 = vmatpush1.msra.mxu0 0.0
    %2406 = vmatprep.subr.mxu0 0.0
    %2407 = vmatpush1.msra.mxu0 0.0
    %2408 = vmatprep.subr.mxu0 0.0
    %2409 = vmatpush1.msra.mxu0 0.0
    %2410 = vmatprep.subr.mxu0 0.0
    %2411 = vmatpush1.msra.mxu0 0.0
    %2412 = vmatprep.subr.mxu0 0.0
    %2413 = vmatpush1.msra.mxu0 0.0
    %2414 = vmatprep.subr.mxu0 0.0
    %2415 = vmatpush1.msra.mxu0 0.0
    %2416 = vmatprep.subr.mxu0 0.0
    %2417 = vmatpush1.msra.mxu0 0.0
    %2418 = vmatprep.subr.mxu0 0.0
    %2419 = vmatpush1.msra.mxu0 0.0
    %2420 = vmatprep.subr.mxu0 0.0
    %2421 = vmatpush1.msra.mxu0 0.0
    %2422 = vmatprep.subr.mxu0 0.0
    %2423 = vmatpush1.msra.mxu0 0.0
    %2424 = vmatprep.subr.mxu0 0.0
    %2425 = vmatpush1.msra.mxu0 0.0
    %2426 = vmatprep.subr.mxu0 0.0
    %2427 = vmatpush1.msra.mxu0 0.0
    %2428 = vmatprep.subr.mxu0 0.0
    %2429 = vmatpush1.msra.mxu0 0.0
    %2430 = vmatprep.subr.mxu0 0.0
    %2431 = vmatpush1.msra.mxu0 0.0
    %2432 = vmatprep.subr.mxu0 0.0
    %2433 = vmatpush1.msra.mxu0 0.0
    %2434 = vmatprep.subr.mxu0 0.0
    %2435 = vmatpush1.msra.mxu0 0.0
    %2436 = vmatprep.mubr.f32.mxu0 0.0
    %2437 = vmatmul.mubr.f32.gmra.mrb[0].mxu0 %v2370
    %v2438 = vpop.f32.mrb[0].mxu0
    %v2439 = vadd.f32 0.0, %v2438
    %v2440 = vpop.f32.mrb[0].mxu0
    %2441 = vdwg.mxu0
    %v2443 = vlaneseq
    %v2444 = vshrl.u32 %v2443, 7
    %v2445 = vsub.s32 0, %v2444
    %v2446 = vrot.slane %v2368, %v2445
    %v2448 = vadd.f32 %v2439, %v2446
    %vm2449 = vcmask 64512
    %2450 = vst.msk [vmem:[%s3] sm:$0xff] %vm2449, %v2448
    // Predicated region
    $region18: #{forward.1} parent=1 // pred_check
      _
    $region19: #{forward.1} parent=1 // pred_check_branch
      %2452 = sbr.rel (0) target = $region21
    $region20: #{forward.1} parent=1 // pred_region
      _
    $region21: #{forward.1} parent=1 // pred_fallthru
      _
    // Predicated region
    $region22: #{forward.1} parent=1 // pred_check
      _
    $region23: #{forward.1} parent=1 // pred_check_branch
      %2454 = sbr.rel (0) target = $region25
    $region24: #{forward.1} parent=1 // pred_region
      _
    $region25: #{forward.1} parent=1 // pred_fallthru
      _
    %2455 = vsyncpa [#allocation3], 1

</llo_original>
